<compile_context>
chip_gen: v7x
topology: tpu7x:2x2x1
jax: 0.10.0
libtpu: 0.0.40
codegen_flags: <defaults>
</compile_context>

<pallas_src>
import math

import jax
import jax.numpy as jnp
from jax.experimental import pallas as pl
from jax.experimental.pallas import tpu as pltpu  # noqa: F401  (grid-free fused kernel needs no TPU-specific params)

# ----------------- config (small synthetic shapes) -----------------
B = 2            # batch size fed to the BERT encoder
S = 8            # sequence length
H = 32           # hidden size
NH = 4           # attention heads
HD = H // NH     # head dim
F_FF = 64        # FFN intermediate size
V = 100          # vocab size
TO_DUP = 2       # torch.repeat_interleave(lhs, to_duplicate, dim=0); static uniform repeat
N = B * TO_DUP   # rows after duplication
C = 4            # number of temporal-relation classes
CLS_AS_CONTEXT = True
BS = B * S       # flattened token rows
OUT_PAD = 128    # lane-dense padded logits slab width
OUT_ROWS = 8     # sublane-padded logits slab height (full (8,128) tile store)
NEG = -1e9

# packed weight-slab column offsets (each block starts on a 128-lane boundary), bf16
COL_QKV = 0      # (H, 3H)    fused Q|K|V, Q pre-scaled by 1/sqrt(HD)
COL_WO = 128     # (H, H)     attention output projection
COL_W1 = 256     # (H, F_FF)  FFN up
COL_WP = 384     # (H, H)     pooler
COL_W2 = 512     # (F_FF, H)  FFN down
COL_WC = 640     # (3H, 128)  classifier, zero-padded to 128 outputs
W_ROWS = 3 * H       # 96
W_COLS = 6 * 128     # 768

# bias/gamma slab rows (f32, (10, 128)); each vector occupies lanes [0:len]
(ROW_BQKV, ROW_BO, ROW_G1, ROW_BLN1, ROW_BF1,
 ROW_BF2, ROW_G2, ROW_BLN2, ROW_BP, ROW_BC) = range(10)
B_ROWS = 10


# ----------------- in-kernel helpers -----------------
def _layernorm(x, g, b, eps=1e-12):
    mu = jnp.mean(x, axis=-1, keepdims=True)
    var = jnp.mean((x - mu) ** 2, axis=-1, keepdims=True)
    return (x - mu) * jax.lax.rsqrt(var + eps) * g + b


def _gelu(x):
    # TODO(synk): tanh-approximate GELU; exact erf-based GELU (HF BERT) differs slightly.
    c = math.sqrt(2.0 / math.pi)
    return 0.5 * x * (1.0 + jnp.tanh(c * (x + 0.044715 * x * x * x)))


# ----------------- single fused forward kernel -----------------
def fused_forward_kernel(x_ref, mask_ref, spancomp_ref, w_ref, b_ref, o_ref):
    f32 = jnp.float32
    bf16 = jnp.bfloat16

    x = x_ref[...]                                   # (BS, H)   f32 token activations
    bias = b_ref[...]                                # (10, 128) f32 bias/gamma slab

    # ---- fused Q/K/V projection: ONE (BS,H)x(H,3H) bf16 matmul, f32 accumulate ----
    qkv = jnp.dot(x.astype(bf16), w_ref[0:H, COL_QKV:COL_QKV + 3 * H],
                  preferred_element_type=f32) + bias[ROW_BQKV:ROW_BQKV + 1, 0:3 * H]   # (BS, 3H)

    # head-major Q/K/V via static lane slices + leading-axis stack (no lane-splitting reshape)
    q_h = jnp.stack([qkv[:, h * HD:(h + 1) * HD] for h in range(NH)], axis=0)          # (NH, BS, HD)
    k_h = jnp.stack([qkv[:, H + h * HD:H + (h + 1) * HD] for h in range(NH)], axis=0)
    v_h = jnp.stack([qkv[:, 2 * H + h * HD:2 * H + (h + 1) * HD] for h in range(NH)], axis=0)

    # ---- attention scores for all heads at once (Q already scaled by 1/sqrt(HD)) ----
    s = jax.lax.dot_general(q_h.astype(bf16), k_h.astype(bf16),
                            (((2,), (2,)), ((0,), (0,))),
                            preferred_element_type=f32)                                 # (NH, BS, BS)
    s = s + mask_ref[...][None, :, :]          # precomputed additive block-diag / key-pad mask

    # softmax (denominator on the EUP via approx reciprocal)
    s = s - jnp.max(s, axis=-1, keepdims=True)
    p = jnp.exp(s)
    p = p * pl.reciprocal(jnp.sum(p, axis=-1, keepdims=True), approx=True)

    ctx = jax.lax.dot_general(p.astype(bf16), v_h.astype(bf16),
                              (((2,), (1,)), ((0,), (0,))),
                              preferred_element_type=f32)                               # (NH, BS, HD)

    # merge heads back to (BS, H) with a lane concat, then ONE (BS,H)x(H,H) output projection
    ctx2d = jnp.concatenate([ctx[h] for h in range(NH)], axis=-1)                       # (BS, H)
    attn = jnp.dot(ctx2d.astype(bf16), w_ref[0:H, COL_WO:COL_WO + H],
                   preferred_element_type=f32) + bias[ROW_BO:ROW_BO + 1, 0:H]

    # ---- add & norm, GELU FFN, add & norm (all elementwise/transcendental math stays f32) ----
    h1 = _layernorm(x + attn, bias[ROW_G1:ROW_G1 + 1, 0:H], bias[ROW_BLN1:ROW_BLN1 + 1, 0:H])
    ff = _gelu(jnp.dot(h1.astype(bf16), w_ref[0:H, COL_W1:COL_W1 + F_FF],
                       preferred_element_type=f32) + bias[ROW_BF1:ROW_BF1 + 1, 0:F_FF])
    ff = jnp.dot(ff.astype(bf16), w_ref[0:F_FF, COL_W2:COL_W2 + H],
                 preferred_element_type=f32) + bias[ROW_BF2:ROW_BF2 + 1, 0:H]
    lhs = _layernorm(h1 + ff, bias[ROW_G2:ROW_G2 + 1, 0:H], bias[ROW_BLN2:ROW_BLN2 + 1, 0:H])

    lhs3 = lhs.reshape(B, S, H)                     # sublane-only split; minor dim unchanged

    # ---- pooler_output = tanh(lhs[:, 0] @ Wp + bp) ----
    cls = jnp.tanh(jnp.dot(lhs3[:, 0, :].astype(bf16), w_ref[0:H, COL_WP:COL_WP + H],
                           preferred_element_type=f32) + bias[ROW_BP:ROW_BP + 1, 0:H])  # (B, H)

    # ---- span-masked max pooling; repeat_interleave stays implicit: both rows of each
    #      duplicated pair (j = 0, 1) read the same lhs[b]. ----
    sc = spancomp_ref[...]                          # (2*TO_DUP, B, S): [span0, span1, comp0, comp1]
    p0 = jnp.max(lhs3 * sc[0][:, :, None] + sc[2][:, :, None], axis=1)                  # (B, H)
    p1 = jnp.max(lhs3 * sc[1][:, :, None] + sc[3][:, :, None], axis=1)                  # (B, H)

    # ---- classifier: ONE (B,3H)x(3H,128) matmul into a lane-dense padded slab ----
    pooled = jnp.concatenate([p0, p1, cls], axis=-1)                                    # (B, 3H)
    logits = jnp.dot(pooled.astype(bf16), w_ref[0:3 * H, COL_WC:COL_WC + OUT_PAD],
                     preferred_element_type=f32) + bias[ROW_BC:ROW_BC + 1, :]           # (B, 128)

    # full-tile (8,128) unmasked store; wrapper slices [:B, :C]
    o_ref[...] = jnp.concatenate(
        [logits, jnp.zeros((OUT_ROWS - B, OUT_PAD), f32)], axis=0).astype(o_ref.dtype)


# ----------------- wrapper: one grid-free pallas_call for the whole forward -----------------
def bert_temp_analysis_forward(input_ids, attention_mask, span_mask, complementary_mask, fused):
    # TODO(synk): the deep-copied pretrained multi-layer BERT is represented by a single
    # synthetic encoder layer; the embedding gather stays in plain-JAX glue.
    x = fused["tok_emb"][input_ids] + fused["pos_emb"][None, :, :]          # (B, S, H)
    x2d = x.astype(jnp.float32).reshape(BS, H)

    # additive attention mask precomputed host-side: 0 where (same example & key valid),
    # -1e9 for cross-example blocks and padded keys (matches the HF additive key mask).
    ex = jnp.arange(BS, dtype=jnp.int32) // S
    same = ex[:, None] == ex[None, :]
    key_valid = attention_mask.astype(jnp.float32).reshape(BS) > 0.5
    attn_mask = jnp.where(same & key_valid[None, :], 0.0, NEG).astype(jnp.float32)      # (BS, BS)

    # (N, S) -> (TO_DUP, B, S): duplicated row b*TO_DUP + j becomes [j, b]; stack span+comp.
    span_t = jnp.transpose(span_mask.astype(jnp.float32).reshape(B, TO_DUP, S), (1, 0, 2))
    comp_t = jnp.transpose(complementary_mask.astype(jnp.float32).reshape(B, TO_DUP, S), (1, 0, 2))
    spancomp = jnp.concatenate([span_t, comp_t], axis=0)                                # (4, B, S)

    padded = pl.pallas_call(
        fused_forward_kernel,
        out_shape=jax.ShapeDtypeStruct((OUT_ROWS, OUT_PAD), jnp.float32),
    )(x2d, attn_mask, spancomp, fused["w_slab"], fused["b_slab"])
    return padded[:B, :C]                                                               # (N // 2, C)


# ----------------- deterministic parameter init (torch-style layout) -----------------
def init_params(key):
    ks = jax.random.split(key, 16)

    def w(k, shape, scale=0.05):
        return jax.random.normal(k, shape, jnp.float32) * scale

    p = {}
    p["tok_emb"] = w(ks[0], (V, H), 0.1)
    p["pos_emb"] = w(ks[1], (S, H), 0.02)
    p["wq"] = w(ks[2], (H, H));  p["bq"] = w(ks[10], (1, H), 0.01)
    p["wk"] = w(ks[3], (H, H));  p["bk"] = w(ks[11], (1, H), 0.01)
    p["wv"] = w(ks[4], (H, H));  p["bv"] = w(ks[12], (1, H), 0.01)
    p["wo"] = w(ks[5], (H, H));  p["bo"] = jnp.zeros((1, H), jnp.float32)
    p["g1"] = jnp.ones((1, H), jnp.float32);  p["bln1"] = jnp.zeros((1, H), jnp.float32)
    p["w1"] = w(ks[6], (H, F_FF)); p["bf1"] = jnp.zeros((1, F_FF), jnp.float32)
    p["w2"] = w(ks[7], (F_FF, H)); p["bf2"] = jnp.zeros((1, H), jnp.float32)
    p["g2"] = jnp.ones((1, H), jnp.float32);  p["bln2"] = jnp.zeros((1, H), jnp.float32)
    p["wp"] = w(ks[8], (H, H));   p["bp"] = jnp.zeros((1, H), jnp.float32)
    cls_in = 3 * H if CLS_AS_CONTEXT else 2 * H
    p["wc"] = w(ks[9], (cls_in, C)); p["bc"] = jnp.zeros((1, C), jnp.float32)
    return p


# ----------------- one-time offline packing into two kernel-ready slabs -----------------
def prepare_fused_params(p):
    scale = 1.0 / math.sqrt(HD)

    # fused (H, 3H) QKV weight / (1, 3H) bias; 1/sqrt(HD) folded into the Q block
    wqkv = jnp.concatenate([p["wq"] * scale, p["wk"], p["wv"]], axis=1)                 # (H, 3H)
    b_qkv = jnp.concatenate([p["bq"] * scale, p["bk"], p["bv"]], axis=1)                # (1, 3H)

    # classifier weights: always packed as a (3H, C) block (zero cls block if unused), lane-padded
    if CLS_AS_CONTEXT:
        wc_full = p["wc"]
    else:
        wc_full = jnp.concatenate([p["wc"], jnp.zeros((H, C), jnp.float32)], axis=0)
    wc_pad = jnp.pad(wc_full, ((0, 0), (0, OUT_PAD - C)))                               # (3H, 128)
    bc_pad = jnp.pad(p["bc"], ((0, 0), (0, OUT_PAD - C)))                               # (1, 128)

    # ONE bf16 weight slab; every block starts on a 128-lane boundary
    w_slab = jnp.zeros((W_ROWS, W_COLS), jnp.float32)
    w_slab = w_slab.at[0:H, COL_QKV:COL_QKV + 3 * H].set(wqkv)
    w_slab = w_slab.at[0:H, COL_WO:COL_WO + H].set(p["wo"])
    w_slab = w_slab.at[0:H, COL_W1:COL_W1 + F_FF].set(p["w1"])
    w_slab = w_slab.at[0:H, COL_WP:COL_WP + H].set(p["wp"])
    w_slab = w_slab.at[0:F_FF, COL_W2:COL_W2 + H].set(p["w2"])
    w_slab = w_slab.at[0:3 * H, COL_WC:COL_WC + OUT_PAD].set(wc_pad)
    w_slab = w_slab.astype(jnp.bfloat16)

    # ONE f32 bias/gamma slab, one vector per row
    b_slab = jnp.zeros((B_ROWS, OUT_PAD), jnp.float32)
    b_slab = b_slab.at[ROW_BQKV:ROW_BQKV + 1, 0:3 * H].set(b_qkv)
    b_slab = b_slab.at[ROW_BO:ROW_BO + 1, 0:H].set(p["bo"])
    b_slab = b_slab.at[ROW_G1:ROW_G1 + 1, 0:H].set(p["g1"])
    b_slab = b_slab.at[ROW_BLN1:ROW_BLN1 + 1, 0:H].set(p["bln1"])
    b_slab = b_slab.at[ROW_BF1:ROW_BF1 + 1, 0:F_FF].set(p["bf1"])
    b_slab = b_slab.at[ROW_BF2:ROW_BF2 + 1, 0:H].set(p["bf2"])
    b_slab = b_slab.at[ROW_G2:ROW_G2 + 1, 0:H].set(p["g2"])
    b_slab = b_slab.at[ROW_BLN2:ROW_BLN2 + 1, 0:H].set(p["bln2"])
    b_slab = b_slab.at[ROW_BP:ROW_BP + 1, 0:H].set(p["bp"])
    b_slab = b_slab.at[ROW_BC:ROW_BC + 1, :].set(bc_pad)

    return {"tok_emb": p["tok_emb"], "pos_emb": p["pos_emb"],
            "w_slab": w_slab, "b_slab": b_slab}


if __name__ == "__main__":
    key = jax.random.PRNGKey(0)
    pkey, ikey = jax.random.split(key)
    params = init_params(pkey)
    fused_params = prepare_fused_params(params)

    # example inputs
    input_ids = jax.random.randint(ikey, (B, S), 0, V, dtype=jnp.int32)
    attention_mask = jnp.ones((B, S), jnp.float32).at[1, -2:].set(0.0)   # pad the tail of ex. 1

    # span masks for the N = B * to_duplicate duplicated rows (one span per row);
    # complementary_mask is 0 on span tokens and very negative elsewhere so max() picks the span.
    span_mask = jnp.zeros((N, S), jnp.float32)
    span_mask = (span_mask.at[0, 1:3].set(1.0)
                           .at[1, 3:5].set(1.0)
                           .at[2, 2:4].set(1.0)
                           .at[3, 4:6].set(1.0))
    complementary_mask = (1.0 - span_mask) * (-1e4)

    fwd = jax.jit(lambda ids, am, sm, cm: bert_temp_analysis_forward(ids, am, sm, cm, fused_params))
    logits = fwd(input_ids, attention_mask, span_mask, complementary_mask)
    jax.block_until_ready(logits)
    assert logits.shape == (N // 2, C)
    print("KERNEL_OK")
</pallas_src>

<mosaic_0001>
module attributes {stable_mosaic.version = 11 : i64} {
  func.func @fused_forward_kernel(%arg0: memref<16x32xf32, #tpu.memory_space<vmem>>, %arg1: memref<16x16xf32, #tpu.memory_space<vmem>>, %arg2: memref<4x2x8xf32, #tpu.memory_space<vmem>>, %arg3: memref<96x768xbf16, #tpu.memory_space<vmem>>, %arg4: memref<10x128xf32, #tpu.memory_space<vmem>>, %arg5: memref<8x128xf32, #tpu.memory_space<vmem>>) attributes {dimension_semantics = [], scalar_prefetch = 0 : i64, scratch_operands = 0 : i64, tpu.core_type = #tpu.core_type<tc>} {
    %c0 = arith.constant 0 : index
    %c0_0 = arith.constant 0 : index
    %0 = vector.load %arg0[%c0, %c0_0] : memref<16x32xf32, #tpu.memory_space<vmem>>, vector<16x32xf32>
    %c0_1 = arith.constant 0 : index
    %c0_2 = arith.constant 0 : index
    %1 = vector.load %arg4[%c0_1, %c0_2] : memref<10x128xf32, #tpu.memory_space<vmem>>, vector<10x128xf32>
    %2 = arith.truncf %0 : vector<16x32xf32> to vector<16x32xbf16>
    %c0_3 = arith.constant 0 : index
    %c0_4 = arith.constant 0 : index
    %3 = vector.load %arg3[%c0_3, %c0_4] : memref<96x768xbf16, #tpu.memory_space<vmem>>, vector<32x96xbf16>
    %cst = arith.constant dense<0.000000e+00> : vector<16x96xf32>
    %4 = tpu.matmul %2, %3, %cst {dimension_numbers = #tpu.dot_dimension_numbers<[1], [0], [0], [1], [0, 0, 1, 1], [], []>} : vector<16x32xbf16>, vector<32x96xbf16>, vector<16x96xf32> -> vector<16x96xf32>
    %5 = vector.extract_strided_slice %1 {offsets = [0, 0], sizes = [1, 96], strides = [1, 1]} : vector<10x128xf32> to vector<1x96xf32>
    %6 = vector.broadcast %5 : vector<1x96xf32> to vector<16x96xf32>
    %7 = arith.addf %4, %6 : vector<16x96xf32>
    %8 = vector.extract_strided_slice %7 {offsets = [0, 0], sizes = [16, 8], strides = [1, 1]} : vector<16x96xf32> to vector<16x8xf32>
    %9 = vector.extract_strided_slice %7 {offsets = [0, 8], sizes = [16, 8], strides = [1, 1]} : vector<16x96xf32> to vector<16x8xf32>
    %10 = vector.extract_strided_slice %7 {offsets = [0, 16], sizes = [16, 8], strides = [1, 1]} : vector<16x96xf32> to vector<16x8xf32>
    %11 = vector.extract_strided_slice %7 {offsets = [0, 24], sizes = [16, 8], strides = [1, 1]} : vector<16x96xf32> to vector<16x8xf32>
    %12 = vector.shape_cast %8 : vector<16x8xf32> to vector<1x16x8xf32>
    %13 = vector.shape_cast %9 : vector<16x8xf32> to vector<1x16x8xf32>
    %14 = vector.shape_cast %10 : vector<16x8xf32> to vector<1x16x8xf32>
    %15 = vector.shape_cast %11 : vector<16x8xf32> to vector<1x16x8xf32>
    %16 = tpu.concatenate %12, %13, %14, %15 in 0 : vector<1x16x8xf32>, vector<1x16x8xf32>, vector<1x16x8xf32>, vector<1x16x8xf32> -> vector<4x16x8xf32>
    %17 = vector.extract_strided_slice %7 {offsets = [0, 32], sizes = [16, 8], strides = [1, 1]} : vector<16x96xf32> to vector<16x8xf32>
    %18 = vector.extract_strided_slice %7 {offsets = [0, 40], sizes = [16, 8], strides = [1, 1]} : vector<16x96xf32> to vector<16x8xf32>
    %19 = vector.extract_strided_slice %7 {offsets = [0, 48], sizes = [16, 8], strides = [1, 1]} : vector<16x96xf32> to vector<16x8xf32>
    %20 = vector.extract_strided_slice %7 {offsets = [0, 56], sizes = [16, 8], strides = [1, 1]} : vector<16x96xf32> to vector<16x8xf32>
    %21 = vector.shape_cast %17 : vector<16x8xf32> to vector<1x16x8xf32>
    %22 = vector.shape_cast %18 : vector<16x8xf32> to vector<1x16x8xf32>
    %23 = vector.shape_cast %19 : vector<16x8xf32> to vector<1x16x8xf32>
    %24 = vector.shape_cast %20 : vector<16x8xf32> to vector<1x16x8xf32>
    %25 = tpu.concatenate %21, %22, %23, %24 in 0 : vector<1x16x8xf32>, vector<1x16x8xf32>, vector<1x16x8xf32>, vector<1x16x8xf32> -> vector<4x16x8xf32>
    %26 = vector.extract_strided_slice %7 {offsets = [0, 64], sizes = [16, 8], strides = [1, 1]} : vector<16x96xf32> to vector<16x8xf32>
    %27 = vector.extract_strided_slice %7 {offsets = [0, 72], sizes = [16, 8], strides = [1, 1]} : vector<16x96xf32> to vector<16x8xf32>
    %28 = vector.extract_strided_slice %7 {offsets = [0, 80], sizes = [16, 8], strides = [1, 1]} : vector<16x96xf32> to vector<16x8xf32>
    %29 = vector.extract_strided_slice %7 {offsets = [0, 88], sizes = [16, 8], strides = [1, 1]} : vector<16x96xf32> to vector<16x8xf32>
    %30 = vector.shape_cast %26 : vector<16x8xf32> to vector<1x16x8xf32>
    %31 = vector.shape_cast %27 : vector<16x8xf32> to vector<1x16x8xf32>
    %32 = vector.shape_cast %28 : vector<16x8xf32> to vector<1x16x8xf32>
    %33 = vector.shape_cast %29 : vector<16x8xf32> to vector<1x16x8xf32>
    %34 = tpu.concatenate %30, %31, %32, %33 in 0 : vector<1x16x8xf32>, vector<1x16x8xf32>, vector<1x16x8xf32>, vector<1x16x8xf32> -> vector<4x16x8xf32>
    %35 = arith.truncf %16 : vector<4x16x8xf32> to vector<4x16x8xbf16>
    %36 = arith.truncf %25 : vector<4x16x8xf32> to vector<4x16x8xbf16>
    %cst_5 = arith.constant dense<0.000000e+00> : vector<4x16x16xf32>
    %37 = tpu.matmul %35, %36, %cst_5 {dimension_numbers = #tpu.dot_dimension_numbers<[2], [2], [1], [1], [0, 0, 0, 1, 1, 1], [0], [0]>} : vector<4x16x8xbf16>, vector<4x16x8xbf16>, vector<4x16x16xf32> -> vector<4x16x16xf32>
    %c0_6 = arith.constant 0 : index
    %c0_7 = arith.constant 0 : index
    %38 = vector.load %arg1[%c0_6, %c0_7] : memref<16x16xf32, #tpu.memory_space<vmem>>, vector<16x16xf32>
    %39 = vector.shape_cast %38 : vector<16x16xf32> to vector<1x16x16xf32>
    %40 = vector.broadcast %39 : vector<1x16x16xf32> to vector<4x16x16xf32>
    %41 = arith.addf %37, %40 : vector<4x16x16xf32>
    %cst_8 = arith.constant dense<0xFF800000> : vector<4x16xf32>
    %42 = vector.multi_reduction <maximumf>, %41, %cst_8 [2] : vector<4x16x16xf32> to vector<4x16xf32>
    %43 = vector.shape_cast %42 : vector<4x16xf32> to vector<4x16x1xf32>
    %44 = vector.broadcast %43 : vector<4x16x1xf32> to vector<4x16x16xf32>
    %45 = arith.subf %41, %44 : vector<4x16x16xf32>
    %46 = math.exp %45 : vector<4x16x16xf32>
    %cst_9 = arith.constant dense<0.000000e+00> : vector<4x16xf32>
    %47 = vector.multi_reduction <add>, %46, %cst_9 [2] : vector<4x16x16xf32> to vector<4x16xf32>
    %48 = vector.shape_cast %47 : vector<4x16xf32> to vector<4x16x1xf32>
    %49 = tpu.reciprocal %48 {approx = true} : vector<4x16x1xf32> -> vector<4x16x1xf32>
    %50 = vector.broadcast %49 : vector<4x16x1xf32> to vector<4x16x16xf32>
    %51 = arith.mulf %46, %50 : vector<4x16x16xf32>
    %52 = arith.truncf %51 : vector<4x16x16xf32> to vector<4x16x16xbf16>
    %53 = arith.truncf %34 : vector<4x16x8xf32> to vector<4x16x8xbf16>
    %cst_10 = arith.constant dense<0.000000e+00> : vector<4x16x8xf32>
    %54 = tpu.matmul %52, %53, %cst_10 {dimension_numbers = #tpu.dot_dimension_numbers<[2], [1], [1], [2], [0, 0, 0, 1, 1, 2], [0], [0]>} : vector<4x16x16xbf16>, vector<4x16x8xbf16>, vector<4x16x8xf32> -> vector<4x16x8xf32>
    %55 = vector.extract_strided_slice %54 {offsets = [0, 0, 0], sizes = [1, 16, 8], strides = [1, 1, 1]} : vector<4x16x8xf32> to vector<1x16x8xf32>
    %56 = vector.shape_cast %55 : vector<1x16x8xf32> to vector<16x8xf32>
    %57 = vector.extract_strided_slice %54 {offsets = [1, 0, 0], sizes = [1, 16, 8], strides = [1, 1, 1]} : vector<4x16x8xf32> to vector<1x16x8xf32>
    %58 = vector.shape_cast %57 : vector<1x16x8xf32> to vector<16x8xf32>
    %59 = vector.extract_strided_slice %54 {offsets = [2, 0, 0], sizes = [1, 16, 8], strides = [1, 1, 1]} : vector<4x16x8xf32> to vector<1x16x8xf32>
    %60 = vector.shape_cast %59 : vector<1x16x8xf32> to vector<16x8xf32>
    %61 = vector.extract_strided_slice %54 {offsets = [3, 0, 0], sizes = [1, 16, 8], strides = [1, 1, 1]} : vector<4x16x8xf32> to vector<1x16x8xf32>
    %62 = vector.shape_cast %61 : vector<1x16x8xf32> to vector<16x8xf32>
    %63 = tpu.concatenate %56, %58, %60, %62 in 1 : vector<16x8xf32>, vector<16x8xf32>, vector<16x8xf32>, vector<16x8xf32> -> vector<16x32xf32>
    %64 = arith.truncf %63 : vector<16x32xf32> to vector<16x32xbf16>
    %c0_11 = arith.constant 0 : index
    %c128 = arith.constant 128 : index
    %65 = vector.load %arg3[%c0_11, %c128] : memref<96x768xbf16, #tpu.memory_space<vmem>>, vector<32x32xbf16>
    %cst_12 = arith.constant dense<0.000000e+00> : vector<16x32xf32>
    %66 = tpu.matmul %64, %65, %cst_12 {dimension_numbers = #tpu.dot_dimension_numbers<[1], [0], [0], [1], [0, 0, 1, 1], [], []>} : vector<16x32xbf16>, vector<32x32xbf16>, vector<16x32xf32> -> vector<16x32xf32>
    %67 = vector.extract_strided_slice %1 {offsets = [1, 0], sizes = [1, 32], strides = [1, 1]} : vector<10x128xf32> to vector<1x32xf32>
    %68 = vector.broadcast %67 : vector<1x32xf32> to vector<16x32xf32>
    %69 = arith.addf %66, %68 : vector<16x32xf32>
    %70 = arith.addf %0, %69 : vector<16x32xf32>
    %71 = vector.extract_strided_slice %1 {offsets = [2, 0], sizes = [1, 32], strides = [1, 1]} : vector<10x128xf32> to vector<1x32xf32>
    %72 = vector.extract_strided_slice %1 {offsets = [3, 0], sizes = [1, 32], strides = [1, 1]} : vector<10x128xf32> to vector<1x32xf32>
    %cst_13 = arith.constant dense<0.000000e+00> : vector<16xf32>
    %73 = vector.multi_reduction <add>, %70, %cst_13 [1] : vector<16x32xf32> to vector<16xf32>
    %74 = vector.shape_cast %73 : vector<16xf32> to vector<16x1xf32>
    %cst_14 = arith.constant 3.200000e+01 : f32
    %75 = vector.broadcast %cst_14 : f32 to vector<16x1xf32>
    %76 = arith.divf %74, %75 : vector<16x1xf32>
    %77 = vector.broadcast %76 : vector<16x1xf32> to vector<16x32xf32>
    %78 = arith.subf %70, %77 : vector<16x32xf32>
    %79 = arith.mulf %78, %78 : vector<16x32xf32>
    %cst_15 = arith.constant dense<0.000000e+00> : vector<16xf32>
    %80 = vector.multi_reduction <add>, %79, %cst_15 [1] : vector<16x32xf32> to vector<16xf32>
    %81 = vector.shape_cast %80 : vector<16xf32> to vector<16x1xf32>
    %cst_16 = arith.constant 3.200000e+01 : f32
    %82 = vector.broadcast %cst_16 : f32 to vector<16x1xf32>
    %83 = arith.divf %81, %82 : vector<16x1xf32>
    %84 = vector.broadcast %76 : vector<16x1xf32> to vector<16x32xf32>
    %85 = arith.subf %70, %84 : vector<16x32xf32>
    %cst_17 = arith.constant 9.99999996E-13 : f32
    %86 = vector.broadcast %cst_17 : f32 to vector<16x1xf32>
    %87 = arith.addf %83, %86 : vector<16x1xf32>
    %88 = math.rsqrt %87 : vector<16x1xf32>
    %89 = vector.broadcast %88 : vector<16x1xf32> to vector<16x32xf32>
    %90 = arith.mulf %85, %89 : vector<16x32xf32>
    %91 = vector.broadcast %71 : vector<1x32xf32> to vector<16x32xf32>
    %92 = arith.mulf %90, %91 : vector<16x32xf32>
    %93 = vector.broadcast %72 : vector<1x32xf32> to vector<16x32xf32>
    %94 = arith.addf %92, %93 : vector<16x32xf32>
    %95 = arith.truncf %94 : vector<16x32xf32> to vector<16x32xbf16>
    %c0_18 = arith.constant 0 : index
    %c256 = arith.constant 256 : index
    %96 = vector.load %arg3[%c0_18, %c256] : memref<96x768xbf16, #tpu.memory_space<vmem>>, vector<32x64xbf16>
    %cst_19 = arith.constant dense<0.000000e+00> : vector<16x64xf32>
    %97 = tpu.matmul %95, %96, %cst_19 {dimension_numbers = #tpu.dot_dimension_numbers<[1], [0], [0], [1], [0, 0, 1, 1], [], []>} : vector<16x32xbf16>, vector<32x64xbf16>, vector<16x64xf32> -> vector<16x64xf32>
    %98 = vector.extract_strided_slice %1 {offsets = [4, 0], sizes = [1, 64], strides = [1, 1]} : vector<10x128xf32> to vector<1x64xf32>
    %99 = vector.broadcast %98 : vector<1x64xf32> to vector<16x64xf32>
    %100 = arith.addf %97, %99 : vector<16x64xf32>
    %cst_20 = arith.constant 5.000000e-01 : f32
    %101 = vector.broadcast %cst_20 : f32 to vector<16x64xf32>
    %102 = arith.mulf %101, %100 : vector<16x64xf32>
    %cst_21 = arith.constant 4.471500e-02 : f32
    %103 = vector.broadcast %cst_21 : f32 to vector<16x64xf32>
    %104 = arith.mulf %103, %100 : vector<16x64xf32>
    %105 = arith.mulf %104, %100 : vector<16x64xf32>
    %106 = arith.mulf %105, %100 : vector<16x64xf32>
    %107 = arith.addf %100, %106 : vector<16x64xf32>
    %cst_22 = arith.constant 0.797884583 : f32
    %108 = vector.broadcast %cst_22 : f32 to vector<16x64xf32>
    %109 = arith.mulf %108, %107 : vector<16x64xf32>
    %110 = math.tanh %109 : vector<16x64xf32>
    %cst_23 = arith.constant 1.000000e+00 : f32
    %111 = vector.broadcast %cst_23 : f32 to vector<16x64xf32>
    %112 = arith.addf %111, %110 : vector<16x64xf32>
    %113 = arith.mulf %102, %112 : vector<16x64xf32>
    %114 = arith.truncf %113 : vector<16x64xf32> to vector<16x64xbf16>
    %c0_24 = arith.constant 0 : index
    %c512 = arith.constant 512 : index
    %115 = vector.load %arg3[%c0_24, %c512] : memref<96x768xbf16, #tpu.memory_space<vmem>>, vector<64x32xbf16>
    %cst_25 = arith.constant dense<0.000000e+00> : vector<16x32xf32>
    %116 = tpu.matmul %114, %115, %cst_25 {dimension_numbers = #tpu.dot_dimension_numbers<[1], [0], [0], [1], [0, 0, 1, 1], [], []>} : vector<16x64xbf16>, vector<64x32xbf16>, vector<16x32xf32> -> vector<16x32xf32>
    %117 = vector.extract_strided_slice %1 {offsets = [5, 0], sizes = [1, 32], strides = [1, 1]} : vector<10x128xf32> to vector<1x32xf32>
    %118 = vector.broadcast %117 : vector<1x32xf32> to vector<16x32xf32>
    %119 = arith.addf %116, %118 : vector<16x32xf32>
    %120 = arith.addf %94, %119 : vector<16x32xf32>
    %121 = vector.extract_strided_slice %1 {offsets = [6, 0], sizes = [1, 32], strides = [1, 1]} : vector<10x128xf32> to vector<1x32xf32>
    %122 = vector.extract_strided_slice %1 {offsets = [7, 0], sizes = [1, 32], strides = [1, 1]} : vector<10x128xf32> to vector<1x32xf32>
    %cst_26 = arith.constant dense<0.000000e+00> : vector<16xf32>
    %123 = vector.multi_reduction <add>, %120, %cst_26 [1] : vector<16x32xf32> to vector<16xf32>
    %124 = vector.shape_cast %123 : vector<16xf32> to vector<16x1xf32>
    %cst_27 = arith.constant 3.200000e+01 : f32
    %125 = vector.broadcast %cst_27 : f32 to vector<16x1xf32>
    %126 = arith.divf %124, %125 : vector<16x1xf32>
    %127 = vector.broadcast %126 : vector<16x1xf32> to vector<16x32xf32>
    %128 = arith.subf %120, %127 : vector<16x32xf32>
    %129 = arith.mulf %128, %128 : vector<16x32xf32>
    %cst_28 = arith.constant dense<0.000000e+00> : vector<16xf32>
    %130 = vector.multi_reduction <add>, %129, %cst_28 [1] : vector<16x32xf32> to vector<16xf32>
    %131 = vector.shape_cast %130 : vector<16xf32> to vector<16x1xf32>
    %cst_29 = arith.constant 3.200000e+01 : f32
    %132 = vector.broadcast %cst_29 : f32 to vector<16x1xf32>
    %133 = arith.divf %131, %132 : vector<16x1xf32>
    %134 = vector.broadcast %126 : vector<16x1xf32> to vector<16x32xf32>
    %135 = arith.subf %120, %134 : vector<16x32xf32>
    %cst_30 = arith.constant 9.99999996E-13 : f32
    %136 = vector.broadcast %cst_30 : f32 to vector<16x1xf32>
    %137 = arith.addf %133, %136 : vector<16x1xf32>
    %138 = math.rsqrt %137 : vector<16x1xf32>
    %139 = vector.broadcast %138 : vector<16x1xf32> to vector<16x32xf32>
    %140 = arith.mulf %135, %139 : vector<16x32xf32>
    %141 = vector.broadcast %121 : vector<1x32xf32> to vector<16x32xf32>
    %142 = arith.mulf %140, %141 : vector<16x32xf32>
    %143 = vector.broadcast %122 : vector<1x32xf32> to vector<16x32xf32>
    %144 = arith.addf %142, %143 : vector<16x32xf32>
    %145 = vector.shape_cast %144 : vector<16x32xf32> to vector<2x8x32xf32>
    %146 = vector.extract_strided_slice %145 {offsets = [0, 0, 0], sizes = [2, 1, 32], strides = [1, 1, 1]} : vector<2x8x32xf32> to vector<2x1x32xf32>
    %147 = vector.shape_cast %146 : vector<2x1x32xf32> to vector<2x32xf32>
    %148 = arith.truncf %147 : vector<2x32xf32> to vector<2x32xbf16>
    %c0_31 = arith.constant 0 : index
    %c384 = arith.constant 384 : index
    %149 = vector.load %arg3[%c0_31, %c384] : memref<96x768xbf16, #tpu.memory_space<vmem>>, vector<32x32xbf16>
    %cst_32 = arith.constant dense<0.000000e+00> : vector<2x32xf32>
    %150 = tpu.matmul %148, %149, %cst_32 {dimension_numbers = #tpu.dot_dimension_numbers<[1], [0], [0], [1], [0, 0, 1, 1], [], []>} : vector<2x32xbf16>, vector<32x32xbf16>, vector<2x32xf32> -> vector<2x32xf32>
    %151 = vector.extract_strided_slice %1 {offsets = [8, 0], sizes = [1, 32], strides = [1, 1]} : vector<10x128xf32> to vector<1x32xf32>
    %152 = vector.broadcast %151 : vector<1x32xf32> to vector<2x32xf32>
    %153 = arith.addf %150, %152 : vector<2x32xf32>
    %154 = math.tanh %153 : vector<2x32xf32>
    %c0_33 = arith.constant 0 : index
    %c0_34 = arith.constant 0 : index
    %c0_35 = arith.constant 0 : index
    %155 = vector.load %arg2[%c0_33, %c0_34, %c0_35] : memref<4x2x8xf32, #tpu.memory_space<vmem>>, vector<4x2x8xf32>
    %156 = vector.extract_strided_slice %155 {offsets = [0, 0, 0], sizes = [1, 2, 8], strides = [1, 1, 1]} : vector<4x2x8xf32> to vector<1x2x8xf32>
    %157 = vector.shape_cast %156 : vector<1x2x8xf32> to vector<2x8xf32>
    %158 = vector.shape_cast %157 : vector<2x8xf32> to vector<2x8x1xf32>
    %159 = vector.broadcast %158 : vector<2x8x1xf32> to vector<2x8x32xf32>
    %160 = arith.mulf %145, %159 : vector<2x8x32xf32>
    %161 = vector.extract_strided_slice %155 {offsets = [2, 0, 0], sizes = [1, 2, 8], strides = [1, 1, 1]} : vector<4x2x8xf32> to vector<1x2x8xf32>
    %162 = vector.shape_cast %161 : vector<1x2x8xf32> to vector<2x8xf32>
    %163 = vector.shape_cast %162 : vector<2x8xf32> to vector<2x8x1xf32>
    %164 = vector.broadcast %163 : vector<2x8x1xf32> to vector<2x8x32xf32>
    %165 = arith.addf %160, %164 : vector<2x8x32xf32>
    %cst_36 = arith.constant dense<0xFF800000> : vector<2x32xf32>
    %166 = vector.multi_reduction <maximumf>, %165, %cst_36 [1] : vector<2x8x32xf32> to vector<2x32xf32>
    %167 = vector.extract_strided_slice %155 {offsets = [1, 0, 0], sizes = [1, 2, 8], strides = [1, 1, 1]} : vector<4x2x8xf32> to vector<1x2x8xf32>
    %168 = vector.shape_cast %167 : vector<1x2x8xf32> to vector<2x8xf32>
    %169 = vector.shape_cast %168 : vector<2x8xf32> to vector<2x8x1xf32>
    %170 = vector.broadcast %169 : vector<2x8x1xf32> to vector<2x8x32xf32>
    %171 = arith.mulf %145, %170 : vector<2x8x32xf32>
    %172 = vector.extract_strided_slice %155 {offsets = [3, 0, 0], sizes = [1, 2, 8], strides = [1, 1, 1]} : vector<4x2x8xf32> to vector<1x2x8xf32>
    %173 = vector.shape_cast %172 : vector<1x2x8xf32> to vector<2x8xf32>
    %174 = vector.shape_cast %173 : vector<2x8xf32> to vector<2x8x1xf32>
    %175 = vector.broadcast %174 : vector<2x8x1xf32> to vector<2x8x32xf32>
    %176 = arith.addf %171, %175 : vector<2x8x32xf32>
    %cst_37 = arith.constant dense<0xFF800000> : vector<2x32xf32>
    %177 = vector.multi_reduction <maximumf>, %176, %cst_37 [1] : vector<2x8x32xf32> to vector<2x32xf32>
    %178 = tpu.concatenate %166, %177, %154 in 1 : vector<2x32xf32>, vector<2x32xf32>, vector<2x32xf32> -> vector<2x96xf32>
    %179 = arith.truncf %178 : vector<2x96xf32> to vector<2x96xbf16>
    %c0_38 = arith.constant 0 : index
    %c640 = arith.constant 640 : index
    %180 = vector.load %arg3[%c0_38, %c640] : memref<96x768xbf16, #tpu.memory_space<vmem>>, vector<96x128xbf16>
    %cst_39 = arith.constant dense<0.000000e+00> : vector<2x128xf32>
    %181 = tpu.matmul %179, %180, %cst_39 {dimension_numbers = #tpu.dot_dimension_numbers<[1], [0], [0], [1], [0, 0, 1, 1], [], []>} : vector<2x96xbf16>, vector<96x128xbf16>, vector<2x128xf32> -> vector<2x128xf32>
    %182 = vector.extract_strided_slice %1 {offsets = [9, 0], sizes = [1, 128], strides = [1, 1]} : vector<10x128xf32> to vector<1x128xf32>
    %183 = vector.broadcast %182 : vector<1x128xf32> to vector<2x128xf32>
    %184 = arith.addf %181, %183 : vector<2x128xf32>
    %cst_40 = arith.constant 0.000000e+00 : f32
    %185 = vector.broadcast %cst_40 : f32 to vector<6x128xf32>
    %186 = tpu.concatenate %184, %185 in 0 : vector<2x128xf32>, vector<6x128xf32> -> vector<8x128xf32>
    %c0_41 = arith.constant 0 : index
    %c0_42 = arith.constant 0 : index
    %187 = vector.load %arg5[%c0_41, %c0_42] : memref<8x128xf32, #tpu.memory_space<vmem>>, vector<8x128xf32>
    tpu.vector_store %arg5[%c0_41, %c0_42], %186 {strides = array<i32>} : memref<8x128xf32, #tpu.memory_space<vmem>>, vector<8x128xf32>,
    return
  }
}

</mosaic_0001>

<llo_original>
// kernel: _lambda_.1
$region0: #{_lambda_.1}
  #allocation0 [shape = 'u32[]', space=smem, size = 0x4, offset = 0x4, fixed_abs, tag = 'smem constant byte address 0x4 - core index']
  #allocation1 [shape = 'u32[144,128]{1,0:T(1,128)}', space=vmem, size = 0x12000, scoped, tag = 'internal scratch']
  %s0 = inlined_call_operand.vmem [shape: f32[16,32], index: 0, kind: input, shape index: {}]
  %s1 = inlined_call_operand.vmem [shape: f32[16,16], index: 1, kind: input, shape index: {}]
  %s2 = inlined_call_operand.vmem [shape: f32[4,2,8], index: 2, kind: input, shape index: {}]
  %s3 = inlined_call_operand.vmem [shape: bf16[96,768], index: 3, kind: input, shape index: {}]
  %s4 = inlined_call_operand.vmem [shape: f32[10,128], index: 4, kind: input, shape index: {}]
  %s5 = inlined_call_operand.vmem [shape: f32[8,128], index: 5, kind: output, shape index: {}]
  %s6 = sld [smem:[#allocation0]]
  $region30: #{_lambda_.1} parent=0
    _
  %s8 = ssub.s32 1, %s6
  %s9 = scalar_select 0, %s8, %s6
  // Predicated region
  $region2: #{_lambda_.1} parent=0 // pred_check
    _
  $region3: #{_lambda_.1} parent=0 // pred_check_branch
    %11 = sbr.rel (0) target = $region5
  $region4: #{_lambda_.1} parent=0 // pred_region
    _
  $region5: #{_lambda_.1} parent=0 // pred_fallthru
    _
  // Predicated region
  $region6: #{_lambda_.1} parent=0 // pred_check
    _
  $region7: #{_lambda_.1} parent=0 // pred_check_branch
    %13 = sbr.rel (0) target = $region9
  $region8: #{_lambda_.1} parent=0 // pred_region
    _
  $region9: #{_lambda_.1} parent=0 // pred_fallthru
    _
  // Predicated region
  $region10: #{_lambda_.1} parent=0 // pred_check
    _
  $region11: #{_lambda_.1} parent=0 // pred_check_branch
    %15 = sbr.rel (0) target = $region13
  $region12: #{_lambda_.1} parent=0 // pred_region
    _
  $region13: #{_lambda_.1} parent=0 // pred_fallthru
    _
  // Predicated region
  $region14: #{_lambda_.1} parent=0 // pred_check
    _
  $region15: #{_lambda_.1} parent=0 // pred_check_branch
    %17 = sbr.rel (0) target = $region17
  $region16: #{_lambda_.1} parent=0 // pred_region
    _
  $region17: #{_lambda_.1} parent=0 // pred_fallthru
    _
  // Predicated region
  $region18: #{_lambda_.1} parent=0 // pred_check
    _
  $region19: #{_lambda_.1} parent=0 // pred_check_branch
    %19 = sbr.rel (0) target = $region21
  $region20: #{_lambda_.1} parent=0 // pred_region
    _
  $region21: #{_lambda_.1} parent=0 // pred_fallthru
    _
  %v21 = vld [vmem:[%s0] sm:$0xff]
  %v22 = vld [vmem:[%s0 + $0x8] sm:$0xff]
  %v23 = vld [vmem:[%s4] sm:$0xff]
  %v24 = vld [vmem:[%s4 + $0x8] sm:$0x3]
  %v25 = vpack.c.bf16 %v22, %v21
  %v26 = vld [vmem:[%s3] sm:$0xf]
  %v27 = vld [vmem:[%s3 + $0x18] sm:$0xf]
  %v28 = vld [vmem:[%s3 + $0x30] sm:$0xf]
  %v29 = vld [vmem:[%s3 + $0x48] sm:$0xf]
  %v30 = vlaneseq
  %v31 = vshrl.u32 %v30, 7
  %v32 = vsub.s32 0, %v31
  %v33 = vrot.slane %v23, %v32
  %v38 = vunpack.c.l.b16 %v26
  %v39 = vunpack.c.l.b16 %v27
  %v40 = vunpack.c.l.b16 %v28
  %v41 = vunpack.c.l.b16 %v29
  %v42 = vpack.c.b16 %v39, %v38
  %v43 = vpack.c.b16 %v41, %v40
  %vm46 = vcmask 261120
  %v48 = vsel %vm46, %v25, 0
  %50 = vmatprep.subr.bf16.mxu0 0
  %51 = vmatpush1.bf16.msra.mxu0 %v42
  %52 = vmatprep.subr.bf16.mxu0 0
  %53 = vmatpush1.bf16.msra.mxu0 %v43
  %54 = vmatprep.subr.bf16.mxu0 0
  %55 = vmatpush1.bf16.msra.mxu0 0
  %56 = vmatprep.subr.bf16.mxu0 0
  %57 = vmatpush1.bf16.msra.mxu0 0
  %58 = vmatprep.subr.bf16.mxu0 0
  %59 = vmatpush1.bf16.msra.mxu0 0
  %60 = vmatprep.subr.bf16.mxu0 0
  %61 = vmatpush1.bf16.msra.mxu0 0
  %62 = vmatprep.subr.bf16.mxu0 0
  %63 = vmatpush1.bf16.msra.mxu0 0
  %64 = vmatprep.subr.bf16.mxu0 0
  %65 = vmatpush1.bf16.msra.mxu0 0
  %66 = vmatprep.subr.bf16.mxu0 0
  %67 = vmatpush1.bf16.msra.mxu0 0
  %68 = vmatprep.subr.bf16.mxu0 0
  %69 = vmatpush1.bf16.msra.mxu0 0
  %70 = vmatprep.subr.bf16.mxu0 0
  %71 = vmatpush1.bf16.msra.mxu0 0
  %72 = vmatprep.subr.bf16.mxu0 0
  %73 = vmatpush1.bf16.msra.mxu0 0
  %74 = vmatprep.subr.bf16.mxu0 0
  %75 = vmatpush1.bf16.msra.mxu0 0
  %76 = vmatprep.subr.bf16.mxu0 0
  %77 = vmatpush1.bf16.msra.mxu0 0
  %78 = vmatprep.subr.bf16.mxu0 0
  %79 = vmatpush1.bf16.msra.mxu0 0
  %80 = vmatprep.subr.bf16.mxu0 0
  %81 = vmatpush1.bf16.msra.mxu0 0
  %82 = vmatprep.mubr.bf16.mxu0 0
  %83 = vmatmul.mubr.bf16.gmra.mrb[0].mxu0 %v48
  %v84 = vpop.f32.mrb[0].mxu0
  %v85 = vadd.f32 %v33, %v84
  %v86 = vpop.f32.mrb[0].mxu0
  %v87 = vpop.f32.mrb[0].mxu0
  %v88 = vadd.f32 %v33, %v87
  %v89 = vpop.f32.mrb[0].mxu0
  %90 = vdwg.mxu0
  %93 = vrot.lane.b32.xlu0 %v85, 120
  %v94 = vpop.permute.xlu0 %93
  %95 = vrot.lane.b32.xlu0 %v88, 120
  %v96 = vpop.permute.xlu0 %95
  %99 = vrot.lane.b32.xlu0 %v85, 112
  %v100 = vpop.permute.xlu0 %99
  %101 = vrot.lane.b32.xlu0 %v88, 112
  %v102 = vpop.permute.xlu0 %101
  %105 = vrot.lane.b32.xlu0 %v85, 104
  %v106 = vpop.permute.xlu0 %105
  %107 = vrot.lane.b32.xlu0 %v88, 104
  %v108 = vpop.permute.xlu0 %107
  %v111 = vpack.c.bf16 %v88, %v85
  %v112 = vpack.c.bf16 %v96, %v94
  %v113 = vpack.c.bf16 %v102, %v100
  %v114 = vpack.c.bf16 %v108, %v106
  %v115 = vld [vmem:[%s1] sm:$0xff]
  %v116 = vld [vmem:[%s1 + $0x8] sm:$0xff]
  %118 = vrot.lane.b32.xlu0 %v111, 96
  %v119 = vpop.permute.xlu0 %118
  %vm120 = vcmask 64512
  %v122 = vsel %vm120, %v111, 0
  %v125 = vsel %vm120, %v119, 0
  %127 = vmatprep.subr.bf16.mxu0 0
  %128 = vmatpush1.bf16.xpose.msra.mxu0 %v125
  %129 = vmatprep.subr.bf16.mxu0 0
  %130 = vmatpush1.bf16.xpose.msra.mxu0 0
  %131 = vmatprep.subr.bf16.mxu0 0
  %132 = vmatpush1.bf16.xpose.msra.mxu0 0
  %133 = vmatprep.subr.bf16.mxu0 0
  %134 = vmatpush1.bf16.xpose.msra.mxu0 0
  %135 = vmatprep.subr.bf16.mxu0 0
  %136 = vmatpush1.bf16.xpose.msra.mxu0 0
  %137 = vmatprep.subr.bf16.mxu0 0
  %138 = vmatpush1.bf16.xpose.msra.mxu0 0
  %139 = vmatprep.subr.bf16.mxu0 0
  %140 = vmatpush1.bf16.xpose.msra.mxu0 0
  %141 = vmatprep.subr.bf16.mxu0 0
  %142 = vmatpush1.bf16.xpose.msra.mxu0 0
  %143 = vmatprep.subr.bf16.mxu0 0
  %144 = vmatpush1.bf16.xpose.msra.mxu0 0
  %145 = vmatprep.subr.bf16.mxu0 0
  %146 = vmatpush1.bf16.xpose.msra.mxu0 0
  %147 = vmatprep.subr.bf16.mxu0 0
  %148 = vmatpush1.bf16.xpose.msra.mxu0 0
  %149 = vmatprep.subr.bf16.mxu0 0
  %150 = vmatpush1.bf16.xpose.msra.mxu0 0
  %151 = vmatprep.subr.bf16.mxu0 0
  %152 = vmatpush1.bf16.xpose.msra.mxu0 0
  %153 = vmatprep.subr.bf16.mxu0 0
  %154 = vmatpush1.bf16.xpose.msra.mxu0 0
  %155 = vmatprep.subr.bf16.mxu0 0
  %156 = vmatpush1.bf16.xpose.msra.mxu0 0
  %157 = vmatprep.subr.bf16.mxu0 0
  %158 = vmatpush1.bf16.xpose.msra.mxu0 0
  %159 = vmatprep.mubr.bf16.mxu0 0
  %160 = vmatmul.mubr.bf16.gmra.mrb[0].mxu0 %v122
  %v161 = vpop.f32.mrb[0].mxu0
  %v162 = vadd.f32 %v115, %v161
  %v163 = vpop.f32.mrb[0].mxu0
  %v164 = vpop.f32.mrb[0].mxu0
  %v165 = vadd.f32 %v116, %v164
  %v166 = vpop.f32.mrb[0].mxu0
  %167 = vdwg.mxu0
  %169 = vrot.lane.b32.xlu0 %v112, 96
  %v170 = vpop.permute.xlu0 %169
  %v172 = vsel %vm120, %v112, 0
  %v175 = vsel %vm120, %v170, 0
  %177 = vmatprep.subr.bf16.mxu0 0
  %178 = vmatpush1.bf16.xpose.msra.mxu0 %v175
  %179 = vmatprep.subr.bf16.mxu0 0
  %180 = vmatpush1.bf16.xpose.msra.mxu0 0
  %181 = vmatprep.subr.bf16.mxu0 0
  %182 = vmatpush1.bf16.xpose.msra.mxu0 0
  %183 = vmatprep.subr.bf16.mxu0 0
  %184 = vmatpush1.bf16.xpose.msra.mxu0 0
  %185 = vmatprep.subr.bf16.mxu0 0
  %186 = vmatpush1.bf16.xpose.msra.mxu0 0
  %187 = vmatprep.subr.bf16.mxu0 0
  %188 = vmatpush1.bf16.xpose.msra.mxu0 0
  %189 = vmatprep.subr.bf16.mxu0 0
  %190 = vmatpush1.bf16.xpose.msra.mxu0 0
  %191 = vmatprep.subr.bf16.mxu0 0
  %192 = vmatpush1.bf16.xpose.msra.mxu0 0
  %193 = vmatprep.subr.bf16.mxu0 0
  %194 = vmatpush1.bf16.xpose.msra.mxu0 0
  %195 = vmatprep.subr.bf16.mxu0 0
  %196 = vmatpush1.bf16.xpose.msra.mxu0 0
  %197 = vmatprep.subr.bf16.mxu0 0
  %198 = vmatpush1.bf16.xpose.msra.mxu0 0
  %199 = vmatprep.subr.bf16.mxu0 0
  %200 = vmatpush1.bf16.xpose.msra.mxu0 0
  %201 = vmatprep.subr.bf16.mxu0 0
  %202 = vmatpush1.bf16.xpose.msra.mxu0 0
  %203 = vmatprep.subr.bf16.mxu0 0
  %204 = vmatpush1.bf16.xpose.msra.mxu0 0
  %205 = vmatprep.subr.bf16.mxu0 0
  %206 = vmatpush1.bf16.xpose.msra.mxu0 0
  %207 = vmatprep.subr.bf16.mxu0 0
  %208 = vmatpush1.bf16.xpose.msra.mxu0 0
  %209 = vmatprep.mubr.bf16.mxu0 0
  %210 = vmatmul.mubr.bf16.gmra.mrb[0].mxu0 %v172
  %v211 = vpop.f32.mrb[0].mxu0
  %v212 = vadd.f32 %v115, %v211
  %v213 = vpop.f32.mrb[0].mxu0
  %v214 = vpop.f32.mrb[0].mxu0
  %v215 = vadd.f32 %v116, %v214
  %v216 = vpop.f32.mrb[0].mxu0
  %217 = vdwg.mxu0
  %219 = vrot.lane.b32.xlu0 %v113, 96
  %v220 = vpop.permute.xlu0 %219
  %v222 = vsel %vm120, %v113, 0
  %v225 = vsel %vm120, %v220, 0
  %227 = vmatprep.subr.bf16.mxu0 0
  %228 = vmatpush1.bf16.xpose.msra.mxu0 %v225
  %229 = vmatprep.subr.bf16.mxu0 0
  %230 = vmatpush1.bf16.xpose.msra.mxu0 0
  %231 = vmatprep.subr.bf16.mxu0 0
  %232 = vmatpush1.bf16.xpose.msra.mxu0 0
  %233 = vmatprep.subr.bf16.mxu0 0
  %234 = vmatpush1.bf16.xpose.msra.mxu0 0
  %235 = vmatprep.subr.bf16.mxu0 0
  %236 = vmatpush1.bf16.xpose.msra.mxu0 0
  %237 = vmatprep.subr.bf16.mxu0 0
  %238 = vmatpush1.bf16.xpose.msra.mxu0 0
  %239 = vmatprep.subr.bf16.mxu0 0
  %240 = vmatpush1.bf16.xpose.msra.mxu0 0
  %241 = vmatprep.subr.bf16.mxu0 0
  %242 = vmatpush1.bf16.xpose.msra.mxu0 0
  %243 = vmatprep.subr.bf16.mxu0 0
  %244 = vmatpush1.bf16.xpose.msra.mxu0 0
  %245 = vmatprep.subr.bf16.mxu0 0
  %246 = vmatpush1.bf16.xpose.msra.mxu0 0
  %247 = vmatprep.subr.bf16.mxu0 0
  %248 = vmatpush1.bf16.xpose.msra.mxu0 0
  %249 = vmatprep.subr.bf16.mxu0 0
  %250 = vmatpush1.bf16.xpose.msra.mxu0 0
  %251 = vmatprep.subr.bf16.mxu0 0
  %252 = vmatpush1.bf16.xpose.msra.mxu0 0
  %253 = vmatprep.subr.bf16.mxu0 0
  %254 = vmatpush1.bf16.xpose.msra.mxu0 0
  %255 = vmatprep.subr.bf16.mxu0 0
  %256 = vmatpush1.bf16.xpose.msra.mxu0 0
  %257 = vmatprep.subr.bf16.mxu0 0
  %258 = vmatpush1.bf16.xpose.msra.mxu0 0
  %259 = vmatprep.mubr.bf16.mxu0 0
  %260 = vmatmul.mubr.bf16.gmra.mrb[0].mxu0 %v222
  %v261 = vpop.f32.mrb[0].mxu0
  %v262 = vadd.f32 %v115, %v261
  %v263 = vpop.f32.mrb[0].mxu0
  %v264 = vpop.f32.mrb[0].mxu0
  %v265 = vadd.f32 %v116, %v264
  %v266 = vpop.f32.mrb[0].mxu0
  %267 = vdwg.mxu0
  %269 = vrot.lane.b32.xlu0 %v114, 96
  %v270 = vpop.permute.xlu0 %269
  %v272 = vsel %vm120, %v114, 0
  %v275 = vsel %vm120, %v270, 0
  %277 = vmatprep.subr.bf16.mxu0 0
  %278 = vmatpush1.bf16.xpose.msra.mxu0 %v275
  %279 = vmatprep.subr.bf16.mxu0 0
  %280 = vmatpush1.bf16.xpose.msra.mxu0 0
  %281 = vmatprep.subr.bf16.mxu0 0
  %282 = vmatpush1.bf16.xpose.msra.mxu0 0
  %283 = vmatprep.subr.bf16.mxu0 0
  %284 = vmatpush1.bf16.xpose.msra.mxu0 0
  %285 = vmatprep.subr.bf16.mxu0 0
  %286 = vmatpush1.bf16.xpose.msra.mxu0 0
  %287 = vmatprep.subr.bf16.mxu0 0
  %288 = vmatpush1.bf16.xpose.msra.mxu0 0
  %289 = vmatprep.subr.bf16.mxu0 0
  %290 = vmatpush1.bf16.xpose.msra.mxu0 0
  %291 = vmatprep.subr.bf16.mxu0 0
  %292 = vmatpush1.bf16.xpose.msra.mxu0 0
  %293 = vmatprep.subr.bf16.mxu0 0
  %294 = vmatpush1.bf16.xpose.msra.mxu0 0
  %295 = vmatprep.subr.bf16.mxu0 0
  %296 = vmatpush1.bf16.xpose.msra.mxu0 0
  %297 = vmatprep.subr.bf16.mxu0 0
  %298 = vmatpush1.bf16.xpose.msra.mxu0 0
  %299 = vmatprep.subr.bf16.mxu0 0
  %300 = vmatpush1.bf16.xpose.msra.mxu0 0
  %301 = vmatprep.subr.bf16.mxu0 0
  %302 = vmatpush1.bf16.xpose.msra.mxu0 0
  %303 = vmatprep.subr.bf16.mxu0 0
  %304 = vmatpush1.bf16.xpose.msra.mxu0 0
  %305 = vmatprep.subr.bf16.mxu0 0
  %306 = vmatpush1.bf16.xpose.msra.mxu0 0
  %307 = vmatprep.subr.bf16.mxu0 0
  %308 = vmatpush1.bf16.xpose.msra.mxu0 0
  %309 = vmatprep.mubr.bf16.mxu0 0
  %310 = vmatmul.mubr.bf16.gmra.mrb[0].mxu0 %v272
  %v311 = vpop.f32.mrb[0].mxu0
  %v312 = vadd.f32 %v115, %v311
  %v313 = vpop.f32.mrb[0].mxu0
  %v314 = vpop.f32.mrb[0].mxu0
  %v315 = vadd.f32 %v116, %v314
  %v316 = vpop.f32.mrb[0].mxu0
  %317 = vdwg.mxu0
  %vm318 = vcmask 130048
  %v319 = vsel %vm318, %v162, -inf
  %320 = vmax.xlane.f32.xlu0 %v319
  %v321 = vpop.xlane.xlu0 %320
  %v322 = vsel %vm318, %v165, -inf
  %323 = vmax.xlane.f32.xlu0 %v322
  %v324 = vpop.xlane.xlu0 %323
  %v325 = vsel %vm318, %v212, -inf
  %326 = vmax.xlane.f32.xlu0 %v325
  %v327 = vpop.xlane.xlu0 %326
  %v328 = vsel %vm318, %v215, -inf
  %329 = vmax.xlane.f32.xlu0 %v328
  %v330 = vpop.xlane.xlu0 %329
  %v331 = vsel %vm318, %v262, -inf
  %332 = vmax.xlane.f32.xlu0 %v331
  %v333 = vpop.xlane.xlu0 %332
  %v334 = vsel %vm318, %v265, -inf
  %335 = vmax.xlane.f32.xlu0 %v334
  %v336 = vpop.xlane.xlu0 %335
  %v337 = vsel %vm318, %v312, -inf
  %338 = vmax.xlane.f32.xlu0 %v337
  %v339 = vpop.xlane.xlu0 %338
  %v340 = vsel %vm318, %v315, -inf
  %341 = vmax.xlane.f32.xlu0 %v340
  %v342 = vpop.xlane.xlu0 %341
  %v343 = vsub.f32 %v162, %v321
  %v344 = vsub.f32 %v165, %v324
  %v345 = vsub.f32 %v212, %v327
  %v346 = vsub.f32 %v215, %v330
  %v347 = vsub.f32 %v262, %v333
  %v348 = vsub.f32 %v265, %v336
  %v349 = vsub.f32 %v312, %v339
  %v350 = vsub.f32 %v315, %v342
  %v351 = vmul.f32 %v343, 1.442695
  %v352 = vpow.pop %v351
  %v353 = vmul.f32 %v344, 1.442695
  %v354 = vpow.pop %v353
  %v355 = vmul.f32 %v345, 1.442695
  %v356 = vpow.pop %v355
  %v357 = vmul.f32 %v346, 1.442695
  %v358 = vpow.pop %v357
  %v359 = vmul.f32 %v347, 1.442695
  %v360 = vpow.pop %v359
  %v361 = vmul.f32 %v348, 1.442695
  %v362 = vpow.pop %v361
  %v363 = vmul.f32 %v349, 1.442695
  %v364 = vpow.pop %v363
  %v365 = vmul.f32 %v350, 1.442695
  %v366 = vpow.pop %v365
  %v367 = vsel %vm318, %v352, 0.0
  %368 = vadd.xlane.f32.xlu0 %v367
  %v369 = vpop.xlane.xlu0 %368
  %v370 = vsel %vm318, %v354, 0.0
  %371 = vadd.xlane.f32.xlu0 %v370
  %v372 = vpop.xlane.xlu0 %371
  %v373 = vsel %vm318, %v356, 0.0
  %374 = vadd.xlane.f32.xlu0 %v373
  %v375 = vpop.xlane.xlu0 %374
  %v376 = vsel %vm318, %v358, 0.0
  %377 = vadd.xlane.f32.xlu0 %v376
  %v378 = vpop.xlane.xlu0 %377
  %v379 = vsel %vm318, %v360, 0.0
  %380 = vadd.xlane.f32.xlu0 %v379
  %v381 = vpop.xlane.xlu0 %380
  %v382 = vsel %vm318, %v362, 0.0
  %383 = vadd.xlane.f32.xlu0 %v382
  %v384 = vpop.xlane.xlu0 %383
  %v385 = vsel %vm318, %v364, 0.0
  %386 = vadd.xlane.f32.xlu0 %v385
  %v387 = vpop.xlane.xlu0 %386
  %v388 = vsel %vm318, %v366, 0.0
  %389 = vadd.xlane.f32.xlu0 %v388
  %v390 = vpop.xlane.xlu0 %389
  %v391 = vrcp.pop %v369
  %v392 = vrcp.pop %v372
  %v393 = vrcp.pop %v375
  %v394 = vrcp.pop %v378
  %v395 = vrcp.pop %v381
  %v396 = vrcp.pop %v384
  %v397 = vrcp.pop %v387
  %v398 = vrcp.pop %v390
  %v399 = vmul.f32 %v352, %v391
  %v400 = vmul.f32 %v354, %v392
  %v401 = vmul.f32 %v356, %v393
  %v402 = vmul.f32 %v358, %v394
  %v403 = vmul.f32 %v360, %v395
  %v404 = vmul.f32 %v362, %v396
  %v405 = vmul.f32 %v364, %v397
  %v406 = vmul.f32 %v366, %v398
  %v407 = vpack.c.bf16 %v400, %v399
  %v408 = vpack.c.bf16 %v402, %v401
  %v409 = vpack.c.bf16 %v404, %v403
  %v410 = vpack.c.bf16 %v406, %v405
  %411 = vrot.lane.b32.xlu0 %v111, 64
  %v412 = vpop.permute.xlu0 %411
  %v415 = vsel %vm318, %v407, 0
  %417 = vmatprep.subr.bf16.mxu0 0
  %418 = vmatpush1.bf16.msra.mxu0 %v412
  %419 = vmatprep.subr.bf16.mxu0 0
  %420 = vmatpush1.bf16.msra.mxu0 0
  %421 = vmatprep.subr.bf16.mxu0 0
  %422 = vmatpush1.bf16.msra.mxu0 0
  %423 = vmatprep.subr.bf16.mxu0 0
  %424 = vmatpush1.bf16.msra.mxu0 0
  %425 = vmatprep.subr.bf16.mxu0 0
  %426 = vmatpush1.bf16.msra.mxu0 0
  %427 = vmatprep.subr.bf16.mxu0 0
  %428 = vmatpush1.bf16.msra.mxu0 0
  %429 = vmatprep.subr.bf16.mxu0 0
  %430 = vmatpush1.bf16.msra.mxu0 0
  %431 = vmatprep.subr.bf16.mxu0 0
  %432 = vmatpush1.bf16.msra.mxu0 0
  %433 = vmatprep.subr.bf16.mxu0 0
  %434 = vmatpush1.bf16.msra.mxu0 0
  %435 = vmatprep.subr.bf16.mxu0 0
  %436 = vmatpush1.bf16.msra.mxu0 0
  %437 = vmatprep.subr.bf16.mxu0 0
  %438 = vmatpush1.bf16.msra.mxu0 0
  %439 = vmatprep.subr.bf16.mxu0 0
  %440 = vmatpush1.bf16.msra.mxu0 0
  %441 = vmatprep.subr.bf16.mxu0 0
  %442 = vmatpush1.bf16.msra.mxu0 0
  %443 = vmatprep.subr.bf16.mxu0 0
  %444 = vmatpush1.bf16.msra.mxu0 0
  %445 = vmatprep.subr.bf16.mxu0 0
  %446 = vmatpush1.bf16.msra.mxu0 0
  %447 = vmatprep.subr.bf16.mxu0 0
  %448 = vmatpush1.bf16.msra.mxu0 0
  %449 = vmatprep.mubr.bf16.mxu0 0
  %450 = vmatmul.mubr.bf16.gmra.mrb[0].mxu0 %v415
  %v451 = vpop.f32.mrb[0].mxu0
  %v452 = vadd.f32 0.0, %v451
  %v453 = vpop.f32.mrb[0].mxu0
  %v454 = vpop.f32.mrb[0].mxu0
  %v455 = vadd.f32 0.0, %v454
  %v456 = vpop.f32.mrb[0].mxu0
  %457 = vdwg.mxu0
  %458 = vrot.lane.b32.xlu0 %v112, 64
  %v459 = vpop.permute.xlu0 %458
  %v462 = vsel %vm318, %v408, 0
  %464 = vmatprep.subr.bf16.mxu0 0
  %465 = vmatpush1.bf16.msra.mxu0 %v459
  %466 = vmatprep.subr.bf16.mxu0 0
  %467 = vmatpush1.bf16.msra.mxu0 0
  %468 = vmatprep.subr.bf16.mxu0 0
  %469 = vmatpush1.bf16.msra.mxu0 0
  %470 = vmatprep.subr.bf16.mxu0 0
  %471 = vmatpush1.bf16.msra.mxu0 0
  %472 = vmatprep.subr.bf16.mxu0 0
  %473 = vmatpush1.bf16.msra.mxu0 0
  %474 = vmatprep.subr.bf16.mxu0 0
  %475 = vmatpush1.bf16.msra.mxu0 0
  %476 = vmatprep.subr.bf16.mxu0 0
  %477 = vmatpush1.bf16.msra.mxu0 0
  %478 = vmatprep.subr.bf16.mxu0 0
  %479 = vmatpush1.bf16.msra.mxu0 0
  %480 = vmatprep.subr.bf16.mxu0 0
  %481 = vmatpush1.bf16.msra.mxu0 0
  %482 = vmatprep.subr.bf16.mxu0 0
  %483 = vmatpush1.bf16.msra.mxu0 0
  %484 = vmatprep.subr.bf16.mxu0 0
  %485 = vmatpush1.bf16.msra.mxu0 0
  %486 = vmatprep.subr.bf16.mxu0 0
  %487 = vmatpush1.bf16.msra.mxu0 0
  %488 = vmatprep.subr.bf16.mxu0 0
  %489 = vmatpush1.bf16.msra.mxu0 0
  %490 = vmatprep.subr.bf16.mxu0 0
  %491 = vmatpush1.bf16.msra.mxu0 0
  %492 = vmatprep.subr.bf16.mxu0 0
  %493 = vmatpush1.bf16.msra.mxu0 0
  %494 = vmatprep.subr.bf16.mxu0 0
  %495 = vmatpush1.bf16.msra.mxu0 0
  %496 = vmatprep.mubr.bf16.mxu0 0
  %497 = vmatmul.mubr.bf16.gmra.mrb[0].mxu0 %v462
  %v498 = vpop.f32.mrb[0].mxu0
  %v499 = vadd.f32 0.0, %v498
  %v500 = vpop.f32.mrb[0].mxu0
  %v501 = vpop.f32.mrb[0].mxu0
  %v502 = vadd.f32 0.0, %v501
  %v503 = vpop.f32.mrb[0].mxu0
  %504 = vdwg.mxu0
  %505 = vrot.lane.b32.xlu0 %v113, 64
  %v506 = vpop.permute.xlu0 %505
  %v509 = vsel %vm318, %v409, 0
  %511 = vmatprep.subr.bf16.mxu0 0
  %512 = vmatpush1.bf16.msra.mxu0 %v506
  %513 = vmatprep.subr.bf16.mxu0 0
  %514 = vmatpush1.bf16.msra.mxu0 0
  %515 = vmatprep.subr.bf16.mxu0 0
  %516 = vmatpush1.bf16.msra.mxu0 0
  %517 = vmatprep.subr.bf16.mxu0 0
  %518 = vmatpush1.bf16.msra.mxu0 0
  %519 = vmatprep.subr.bf16.mxu0 0
  %520 = vmatpush1.bf16.msra.mxu0 0
  %521 = vmatprep.subr.bf16.mxu0 0
  %522 = vmatpush1.bf16.msra.mxu0 0
  %523 = vmatprep.subr.bf16.mxu0 0
  %524 = vmatpush1.bf16.msra.mxu0 0
  %525 = vmatprep.subr.bf16.mxu0 0
  %526 = vmatpush1.bf16.msra.mxu0 0
  %527 = vmatprep.subr.bf16.mxu0 0
  %528 = vmatpush1.bf16.msra.mxu0 0
  %529 = vmatprep.subr.bf16.mxu0 0
  %530 = vmatpush1.bf16.msra.mxu0 0
  %531 = vmatprep.subr.bf16.mxu0 0
  %532 = vmatpush1.bf16.msra.mxu0 0
  %533 = vmatprep.subr.bf16.mxu0 0
  %534 = vmatpush1.bf16.msra.mxu0 0
  %535 = vmatprep.subr.bf16.mxu0 0
  %536 = vmatpush1.bf16.msra.mxu0 0
  %537 = vmatprep.subr.bf16.mxu0 0
  %538 = vmatpush1.bf16.msra.mxu0 0
  %539 = vmatprep.subr.bf16.mxu0 0
  %540 = vmatpush1.bf16.msra.mxu0 0
  %541 = vmatprep.subr.bf16.mxu0 0
  %542 = vmatpush1.bf16.msra.mxu0 0
  %543 = vmatprep.mubr.bf16.mxu0 0
  %544 = vmatmul.mubr.bf16.gmra.mrb[0].mxu0 %v509
  %v545 = vpop.f32.mrb[0].mxu0
  %v546 = vadd.f32 0.0, %v545
  %v547 = vpop.f32.mrb[0].mxu0
  %v548 = vpop.f32.mrb[0].mxu0
  %v549 = vadd.f32 0.0, %v548
  %v550 = vpop.f32.mrb[0].mxu0
  %551 = vdwg.mxu0
  %552 = vrot.lane.b32.xlu0 %v114, 64
  %v553 = vpop.permute.xlu0 %552
  %v556 = vsel %vm318, %v410, 0
  %558 = vmatprep.subr.bf16.mxu0 0
  %559 = vmatpush1.bf16.msra.mxu0 %v553
  %560 = vmatprep.subr.bf16.mxu0 0
  %561 = vmatpush1.bf16.msra.mxu0 0
  %562 = vmatprep.subr.bf16.mxu0 0
  %563 = vmatpush1.bf16.msra.mxu0 0
  %564 = vmatprep.subr.bf16.mxu0 0
  %565 = vmatpush1.bf16.msra.mxu0 0
  %566 = vmatprep.subr.bf16.mxu0 0
  %567 = vmatpush1.bf16.msra.mxu0 0
  %568 = vmatprep.subr.bf16.mxu0 0
  %569 = vmatpush1.bf16.msra.mxu0 0
  %570 = vmatprep.subr.bf16.mxu0 0
  %571 = vmatpush1.bf16.msra.mxu0 0
  %572 = vmatprep.subr.bf16.mxu0 0
  %573 = vmatpush1.bf16.msra.mxu0 0
  %574 = vmatprep.subr.bf16.mxu0 0
  %575 = vmatpush1.bf16.msra.mxu0 0
  %576 = vmatprep.subr.bf16.mxu0 0
  %577 = vmatpush1.bf16.msra.mxu0 0
  %578 = vmatprep.subr.bf16.mxu0 0
  %579 = vmatpush1.bf16.msra.mxu0 0
  %580 = vmatprep.subr.bf16.mxu0 0
  %581 = vmatpush1.bf16.msra.mxu0 0
  %582 = vmatprep.subr.bf16.mxu0 0
  %583 = vmatpush1.bf16.msra.mxu0 0
  %584 = vmatprep.subr.bf16.mxu0 0
  %585 = vmatpush1.bf16.msra.mxu0 0
  %586 = vmatprep.subr.bf16.mxu0 0
  %587 = vmatpush1.bf16.msra.mxu0 0
  %588 = vmatprep.subr.bf16.mxu0 0
  %589 = vmatpush1.bf16.msra.mxu0 0
  %590 = vmatprep.mubr.bf16.mxu0 0
  %591 = vmatmul.mubr.bf16.gmra.mrb[0].mxu0 %v556
  %v592 = vpop.f32.mrb[0].mxu0
  %v593 = vadd.f32 0.0, %v592
  %v594 = vpop.f32.mrb[0].mxu0
  %v595 = vpop.f32.mrb[0].mxu0
  %v596 = vadd.f32 0.0, %v595
  %v597 = vpop.f32.mrb[0].mxu0
  %598 = vdwg.mxu0
  %601 = vrot.lane.b32.xlu0 %v499, 8
  %v602 = vpop.permute.xlu0 %601
  %603 = vrot.lane.b32.xlu0 %v502, 8
  %v604 = vpop.permute.xlu0 %603
  %609 = vrot.lane.b32.xlu0 %v546, 16
  %v610 = vpop.permute.xlu0 %609
  %611 = vrot.lane.b32.xlu0 %v549, 16
  %v612 = vpop.permute.xlu0 %611
  %617 = vrot.lane.b32.xlu0 %v593, 24
  %v618 = vpop.permute.xlu0 %617
  %619 = vrot.lane.b32.xlu0 %v596, 24
  %v620 = vpop.permute.xlu0 %619
  %v623 = vsel %vm120, %v452, %v602
  %v624 = vsel %vm120, %v455, %v604
  %v625 = vsel %vm318, %v623, %v610
  %v626 = vsel %vm318, %v624, %v612
  %vm627 = vcmask 195584
  %v628 = vsel %vm627, %v625, %v618
  %v629 = vsel %vm627, %v626, %v620
  %v630 = vpack.c.bf16 %v629, %v628
  %v631 = vld [vmem:[%s3 + $0x4] sm:$0xf]
  %v632 = vld [vmem:[%s3 + $0x1c] sm:$0xf]
  %v633 = vld [vmem:[%s3 + $0x34] sm:$0xf]
  %v634 = vld [vmem:[%s3 + $0x4c] sm:$0xf]
  %v635 = vlaneseq
  %v636 = vshrl.u32 %v635, 7
  %v637 = vsub.s32 1, %v636
  %v638 = vrot.slane %v23, %v637
  %v643 = vunpack.c.l.b16 %v631
  %v644 = vunpack.c.l.b16 %v632
  %v645 = vunpack.c.l.b16 %v633
  %v646 = vunpack.c.l.b16 %v634
  %v647 = vpack.c.b16 %v644, %v643
  %v648 = vpack.c.b16 %v646, %v645
  %v652 = vsel %vm46, %v630, 0
  %654 = vmatprep.subr.bf16.mxu0 0
  %655 = vmatpush1.bf16.msra.mxu0 %v647
  %656 = vmatprep.subr.bf16.mxu0 0
  %657 = vmatpush1.bf16.msra.mxu0 %v648
  %658 = vmatprep.subr.bf16.mxu0 0
  %659 = vmatpush1.bf16.msra.mxu0 0
  %660 = vmatprep.subr.bf16.mxu0 0
  %661 = vmatpush1.bf16.msra.mxu0 0
  %662 = vmatprep.subr.bf16.mxu0 0
  %663 = vmatpush1.bf16.msra.mxu0 0
  %664 = vmatprep.subr.bf16.mxu0 0
  %665 = vmatpush1.bf16.msra.mxu0 0
  %666 = vmatprep.subr.bf16.mxu0 0
  %667 = vmatpush1.bf16.msra.mxu0 0
  %668 = vmatprep.subr.bf16.mxu0 0
  %669 = vmatpush1.bf16.msra.mxu0 0
  %670 = vmatprep.subr.bf16.mxu0 0
  %671 = vmatpush1.bf16.msra.mxu0 0
  %672 = vmatprep.subr.bf16.mxu0 0
  %673 = vmatpush1.bf16.msra.mxu0 0
  %674 = vmatprep.subr.bf16.mxu0 0
  %675 = vmatpush1.bf16.msra.mxu0 0
  %676 = vmatprep.subr.bf16.mxu0 0
  %677 = vmatpush1.bf16.msra.mxu0 0
  %678 = vmatprep.subr.bf16.mxu0 0
  %679 = vmatpush1.bf16.msra.mxu0 0
  %680 = vmatprep.subr.bf16.mxu0 0
  %681 = vmatpush1.bf16.msra.mxu0 0
  %682 = vmatprep.subr.bf16.mxu0 0
  %683 = vmatpush1.bf16.msra.mxu0 0
  %684 = vmatprep.subr.bf16.mxu0 0
  %685 = vmatpush1.bf16.msra.mxu0 0
  %686 = vmatprep.mubr.bf16.mxu0 0
  %687 = vmatmul.mubr.bf16.gmra.mrb[0].mxu0 %v652
  %v688 = vpop.f32.mrb[0].mxu0
  %v689 = vadd.f32 %v638, %v688
  %v690 = vpop.f32.mrb[0].mxu0
  %v691 = vpop.f32.mrb[0].mxu0
  %v692 = vadd.f32 %v638, %v691
  %v693 = vpop.f32.mrb[0].mxu0
  %694 = vdwg.mxu0
  %v695 = vadd.f32 %v21, %v689
  %v696 = vadd.f32 %v22, %v692
  %v697 = vsel %vm46, %v695, 0.0
  %698 = vadd.xlane.f32.xlu0 %v697
  %v699 = vpop.xlane.xlu0 %698
  %v700 = vsel %vm46, %v696, 0.0
  %701 = vadd.xlane.f32.xlu0 %v700
  %v702 = vpop.xlane.xlu0 %701
  %v703 = vrcp.pop 32.0
  %v704 = vmul.f32 %v699, %v703
  %v705 = vmul.f32 %v702, %v703
  %v706 = vsub.f32 %v695, %v704
  %v707 = vsub.f32 %v696, %v705
  %v708 = vmul.f32 %v706, %v706
  %v709 = vmul.f32 %v707, %v707
  %v710 = vsel %vm46, %v708, 0.0
  %711 = vadd.xlane.f32.xlu0 %v710
  %v712 = vpop.xlane.xlu0 %711
  %v713 = vsel %vm46, %v709, 0.0
  %714 = vadd.xlane.f32.xlu0 %v713
  %v715 = vpop.xlane.xlu0 %714
  %v716 = vmul.f32 %v712, %v703
  %v717 = vmul.f32 %v715, %v703
  %v718 = vadd.f32 %v716, 1e-12
  %v719 = vadd.f32 %v717, 1e-12
  %v720 = vrsqrt.pop %v718
  %v721 = vrsqrt.pop %v719
  %v722 = vmul.f32 %v706, %v720
  %v723 = vmul.f32 %v707, %v721
  %v724 = vlaneseq
  %v725 = vshrl.u32 %v724, 7
  %v726 = vsub.s32 2, %v725
  %v727 = vrot.slane %v23, %v726
  %v728 = vmul.f32 %v722, %v727
  %v729 = vmul.f32 %v723, %v727
  %v730 = vlaneseq
  %v731 = vshrl.u32 %v730, 7
  %v732 = vsub.s32 3, %v731
  %v733 = vrot.slane %v23, %v732
  %v734 = vadd.f32 %v728, %v733
  %v735 = vadd.f32 %v729, %v733
  %v736 = vpack.c.bf16 %v735, %v734
  %v737 = vld [vmem:[%s3 + $0x8] sm:$0xf]
  %v738 = vld [vmem:[%s3 + $0x20] sm:$0xf]
  %v739 = vld [vmem:[%s3 + $0x38] sm:$0xf]
  %v740 = vld [vmem:[%s3 + $0x50] sm:$0xf]
  %v741 = vlaneseq
  %v742 = vshrl.u32 %v741, 7
  %v743 = vsub.s32 4, %v742
  %v744 = vrot.slane %v23, %v743
  %v749 = vunpack.c.l.b16 %v737
  %v750 = vunpack.c.l.b16 %v738
  %v751 = vunpack.c.l.b16 %v739
  %v752 = vunpack.c.l.b16 %v740
  %v753 = vpack.c.b16 %v750, %v749
  %v754 = vpack.c.b16 %v752, %v751
  %v758 = vsel %vm46, %v736, 0
  %760 = vmatprep.subr.bf16.mxu0 0
  %761 = vmatpush1.bf16.msra.mxu0 %v753
  %762 = vmatprep.subr.bf16.mxu0 0
  %763 = vmatpush1.bf16.msra.mxu0 %v754
  %764 = vmatprep.subr.bf16.mxu0 0
  %765 = vmatpush1.bf16.msra.mxu0 0
  %766 = vmatprep.subr.bf16.mxu0 0
  %767 = vmatpush1.bf16.msra.mxu0 0
  %768 = vmatprep.subr.bf16.mxu0 0
  %769 = vmatpush1.bf16.msra.mxu0 0
  %770 = vmatprep.subr.bf16.mxu0 0
  %771 = vmatpush1.bf16.msra.mxu0 0
  %772 = vmatprep.subr.bf16.mxu0 0
  %773 = vmatpush1.bf16.msra.mxu0 0
  %774 = vmatprep.subr.bf16.mxu0 0
  %775 = vmatpush1.bf16.msra.mxu0 0
  %776 = vmatprep.subr.bf16.mxu0 0
  %777 = vmatpush1.bf16.msra.mxu0 0
  %778 = vmatprep.subr.bf16.mxu0 0
  %779 = vmatpush1.bf16.msra.mxu0 0
  %780 = vmatprep.subr.bf16.mxu0 0
  %781 = vmatpush1.bf16.msra.mxu0 0
  %782 = vmatprep.subr.bf16.mxu0 0
  %783 = vmatpush1.bf16.msra.mxu0 0
  %784 = vmatprep.subr.bf16.mxu0 0
  %785 = vmatpush1.bf16.msra.mxu0 0
  %786 = vmatprep.subr.bf16.mxu0 0
  %787 = vmatpush1.bf16.msra.mxu0 0
  %788 = vmatprep.subr.bf16.mxu0 0
  %789 = vmatpush1.bf16.msra.mxu0 0
  %790 = vmatprep.subr.bf16.mxu0 0
  %791 = vmatpush1.bf16.msra.mxu0 0
  %792 = vmatprep.mubr.bf16.mxu0 0
  %793 = vmatmul.mubr.bf16.gmra.mrb[0].mxu0 %v758
  %v794 = vpop.f32.mrb[0].mxu0
  %v795 = vadd.f32 %v744, %v794
  %v796 = vpop.f32.mrb[0].mxu0
  %v797 = vpop.f32.mrb[0].mxu0
  %v798 = vadd.f32 %v744, %v797
  %v799 = vpop.f32.mrb[0].mxu0
  %800 = vdwg.mxu0
  %v801 = vmul.f32 %v795, 0.5
  %v802 = vmul.f32 %v798, 0.5
  %v803 = vmul.f32 %v795, 0.044715
  %v804 = vmul.f32 %v798, 0.044715
  %v805 = vmul.f32 %v803, %v795
  %v806 = vmul.f32 %v804, %v798
  %v807 = vmul.f32 %v805, %v795
  %v808 = vmul.f32 %v806, %v798
  %v809 = vadd.f32 %v795, %v807
  %v810 = vadd.f32 %v798, %v808
  %v811 = vmul.f32 %v809, 0.7978846
  %v812 = vmul.f32 %v810, 0.7978846
  %v813 = vtanh.pop %v811
  %v814 = vtanh.pop %v812
  %v815 = vadd.f32 %v813, 1.0
  %v816 = vadd.f32 %v814, 1.0
  %v817 = vmul.f32 %v801, %v815
  %v818 = vmul.f32 %v802, %v816
  %v819 = vpack.c.bf16 %v818, %v817
  %v820 = vld [vmem:[%s3 + $0x10] sm:$0xf]
  %v821 = vld [vmem:[%s3 + $0x28] sm:$0xf]
  %v822 = vld [vmem:[%s3 + $0x40] sm:$0xf]
  %v823 = vld [vmem:[%s3 + $0x58] sm:$0xf]
  %v824 = vld [vmem:[%s3 + $0x70] sm:$0xf]
  %v825 = vld [vmem:[%s3 + $0x88] sm:$0xf]
  %v826 = vld [vmem:[%s3 + $0xa0] sm:$0xf]
  %v827 = vld [vmem:[%s3 + $0xb8] sm:$0xf]
  %v828 = vlaneseq
  %v829 = vshrl.u32 %v828, 7
  %v830 = vsub.s32 5, %v829
  %v831 = vrot.slane %v23, %v830
  %v840 = vunpack.c.l.b16 %v820
  %v841 = vunpack.c.l.b16 %v821
  %v842 = vunpack.c.l.b16 %v822
  %v843 = vunpack.c.l.b16 %v823
  %v844 = vunpack.c.l.b16 %v824
  %v845 = vunpack.c.l.b16 %v825
  %v846 = vunpack.c.l.b16 %v826
  %v847 = vunpack.c.l.b16 %v827
  %v848 = vpack.c.b16 %v841, %v840
  %v849 = vpack.c.b16 %v843, %v842
  %v850 = vpack.c.b16 %v845, %v844
  %v851 = vpack.c.b16 %v847, %v846
  %vm856 = vcmask 523264
  %v858 = vsel %vm856, %v819, 0
  %860 = vmatprep.subr.bf16.mxu0 0
  %861 = vmatpush1.bf16.msra.mxu0 %v848
  %862 = vmatprep.subr.bf16.mxu0 0
  %863 = vmatpush1.bf16.msra.mxu0 %v849
  %864 = vmatprep.subr.bf16.mxu0 0
  %865 = vmatpush1.bf16.msra.mxu0 %v850
  %866 = vmatprep.subr.bf16.mxu0 0
  %867 = vmatpush1.bf16.msra.mxu0 %v851
  %868 = vmatprep.subr.bf16.mxu0 0
  %869 = vmatpush1.bf16.msra.mxu0 0
  %870 = vmatprep.subr.bf16.mxu0 0
  %871 = vmatpush1.bf16.msra.mxu0 0
  %872 = vmatprep.subr.bf16.mxu0 0
  %873 = vmatpush1.bf16.msra.mxu0 0
  %874 = vmatprep.subr.bf16.mxu0 0
  %875 = vmatpush1.bf16.msra.mxu0 0
  %876 = vmatprep.subr.bf16.mxu0 0
  %877 = vmatpush1.bf16.msra.mxu0 0
  %878 = vmatprep.subr.bf16.mxu0 0
  %879 = vmatpush1.bf16.msra.mxu0 0
  %880 = vmatprep.subr.bf16.mxu0 0
  %881 = vmatpush1.bf16.msra.mxu0 0
  %882 = vmatprep.subr.bf16.mxu0 0
  %883 = vmatpush1.bf16.msra.mxu0 0
  %884 = vmatprep.subr.bf16.mxu0 0
  %885 = vmatpush1.bf16.msra.mxu0 0
  %886 = vmatprep.subr.bf16.mxu0 0
  %887 = vmatpush1.bf16.msra.mxu0 0
  %888 = vmatprep.subr.bf16.mxu0 0
  %889 = vmatpush1.bf16.msra.mxu0 0
  %890 = vmatprep.subr.bf16.mxu0 0
  %891 = vmatpush1.bf16.msra.mxu0 0
  %892 = vmatprep.mubr.bf16.mxu0 0
  %893 = vmatmul.mubr.bf16.gmra.mrb[0].mxu0 %v858
  %v894 = vpop.f32.mrb[0].mxu0
  %v895 = vadd.f32 %v831, %v894
  %v896 = vpop.f32.mrb[0].mxu0
  %v897 = vpop.f32.mrb[0].mxu0
  %v898 = vadd.f32 %v831, %v897
  %v899 = vpop.f32.mrb[0].mxu0
  %900 = vdwg.mxu0
  %v901 = vadd.f32 %v734, %v895
  %v902 = vadd.f32 %v735, %v898
  %v903 = vsel %vm46, %v901, 0.0
  %904 = vadd.xlane.f32.xlu0 %v903
  %v905 = vpop.xlane.xlu0 %904
  %v906 = vsel %vm46, %v902, 0.0
  %907 = vadd.xlane.f32.xlu0 %v906
  %v908 = vpop.xlane.xlu0 %907
  %v909 = vmul.f32 %v905, %v703
  %v910 = vmul.f32 %v908, %v703
  %v911 = vsub.f32 %v901, %v909
  %v912 = vsub.f32 %v902, %v910
  %v913 = vmul.f32 %v911, %v911
  %v914 = vmul.f32 %v912, %v912
  %v915 = vsel %vm46, %v913, 0.0
  %916 = vadd.xlane.f32.xlu0 %v915
  %v917 = vpop.xlane.xlu0 %916
  %v918 = vsel %vm46, %v914, 0.0
  %919 = vadd.xlane.f32.xlu0 %v918
  %v920 = vpop.xlane.xlu0 %919
  %v921 = vmul.f32 %v917, %v703
  %v922 = vmul.f32 %v920, %v703
  %v923 = vadd.f32 %v921, 1e-12
  %v924 = vadd.f32 %v922, 1e-12
  %v925 = vrsqrt.pop %v923
  %v926 = vrsqrt.pop %v924
  %v927 = vmul.f32 %v911, %v925
  %v928 = vmul.f32 %v912, %v926
  %v929 = vlaneseq
  %v930 = vshrl.u32 %v929, 7
  %v931 = vsub.s32 6, %v930
  %v932 = vrot.slane %v23, %v931
  %v933 = vmul.f32 %v927, %v932
  %v934 = vmul.f32 %v928, %v932
  %v935 = vlaneseq
  %v936 = vshrl.u32 %v935, 7
  %v937 = vsub.s32 7, %v936
  %v938 = vrot.slane %v23, %v937
  %v939 = vadd.f32 %v933, %v938
  %v940 = vadd.f32 %v934, %v938
  %v941 = vpack.c.bf16 %v939, %v939
  %v942 = vpack.c.bf16 %v940, %v940
  %v943 = vld [vmem:[%s3 + $0xc] sm:$0xf]
  %v944 = vld [vmem:[%s3 + $0x24] sm:$0xf]
  %v945 = vld [vmem:[%s3 + $0x3c] sm:$0xf]
  %v946 = vld [vmem:[%s3 + $0x54] sm:$0xf]
  %v947 = vlaneseq
  %v948 = vshrl.u32 %v947, 7
  %v949 = vsub.s32 0, %v948
  %v950 = vrot.slane %v24, %v949
  %v953 = vunpack.c.l.b16 %v941
  %v954 = vunpack.c.l.b16 %v942
  %v955 = vrot.slane %v954, 7
  %vm956 = vcmask 1041409
  %v957 = vsel %vm956, %v955, %v953
  %v958 = vpack.c.b16 %v957, %v957
  %v963 = vunpack.c.l.b16 %v943
  %v964 = vunpack.c.l.b16 %v944
  %v965 = vunpack.c.l.b16 %v945
  %v966 = vunpack.c.l.b16 %v946
  %v967 = vpack.c.b16 %v964, %v963
  %v968 = vpack.c.b16 %v966, %v965
  %v972 = vsel %vm46, %v958, 0
  %974 = vmatprep.subr.bf16.mxu0 0
  %975 = vmatpush1.bf16.msra.mxu0 %v967
  %976 = vmatprep.subr.bf16.mxu0 0
  %977 = vmatpush1.bf16.msra.mxu0 %v968
  %978 = vmatprep.subr.bf16.mxu0 0
  %979 = vmatpush1.bf16.msra.mxu0 0
  %980 = vmatprep.subr.bf16.mxu0 0
  %981 = vmatpush1.bf16.msra.mxu0 0
  %982 = vmatprep.subr.bf16.mxu0 0
  %983 = vmatpush1.bf16.msra.mxu0 0
  %984 = vmatprep.subr.bf16.mxu0 0
  %985 = vmatpush1.bf16.msra.mxu0 0
  %986 = vmatprep.subr.bf16.mxu0 0
  %987 = vmatpush1.bf16.msra.mxu0 0
  %988 = vmatprep.subr.bf16.mxu0 0
  %989 = vmatpush1.bf16.msra.mxu0 0
  %990 = vmatprep.subr.bf16.mxu0 0
  %991 = vmatpush1.bf16.msra.mxu0 0
  %992 = vmatprep.subr.bf16.mxu0 0
  %993 = vmatpush1.bf16.msra.mxu0 0
  %994 = vmatprep.subr.bf16.mxu0 0
  %995 = vmatpush1.bf16.msra.mxu0 0
  %996 = vmatprep.subr.bf16.mxu0 0
  %997 = vmatpush1.bf16.msra.mxu0 0
  %998 = vmatprep.subr.bf16.mxu0 0
  %999 = vmatpush1.bf16.msra.mxu0 0
  %1000 = vmatprep.subr.bf16.mxu0 0
  %1001 = vmatpush1.bf16.msra.mxu0 0
  %1002 = vmatprep.subr.bf16.mxu0 0
  %1003 = vmatpush1.bf16.msra.mxu0 0
  %1004 = vmatprep.subr.bf16.mxu0 0
  %1005 = vmatpush1.bf16.msra.mxu0 0
  %1006 = vmatprep.mubr.bf16.mxu0 0
  %1007 = vmatmul.mubr.bf16.gmra.mrb[0].mxu0 %v972
  %v1008 = vpop.f32.mrb[0].mxu0
  %v1009 = vadd.f32 %v950, %v1008
  %v1010 = vpop.f32.mrb[0].mxu0
  %v1011 = vpop.f32.mrb[0].mxu0
  %v1012 = vpop.f32.mrb[0].mxu0
  %1013 = vdwg.mxu0
  %v1014 = vtanh.pop %v1009
  %v1015 = vld [vmem:[%s2] sm:$0x3]
  %v1016 = vld [vmem:[%s2 + $0x2] sm:$0x3]
  %v1017 = vld [vmem:[%s2 + $0x4] sm:$0x3]
  %v1018 = vld [vmem:[%s2 + $0x6] sm:$0x3]
  %v1019 = vlaneseq
  %v1020 = vshrl.u32 %v1019, 7
  %v1021 = vsub.s32 0, %v1020
  %v1022 = vrot.slane %v1015, %v1021
  %1024 = vbcast.lane.b32.xlu0 %v1022, 256
  %v1025 = vpop.permute.xlu0 %1024
  %v1026 = vlaneseq
  %v1027 = vshrl.u32 %v1026, 7
  %v1028 = vsub.s32 1, %v1027
  %v1029 = vrot.slane %v1015, %v1028
  %1031 = vbcast.lane.b32.xlu0 %v1029, 256
  %v1032 = vpop.permute.xlu0 %1031
  %v1033 = vmul.f32 %v939, %v1025
  %v1034 = vmul.f32 %v940, %v1032
  %v1035 = vlaneseq
  %v1036 = vshrl.u32 %v1035, 7
  %v1037 = vsub.s32 0, %v1036
  %v1038 = vrot.slane %v1017, %v1037
  %1040 = vbcast.lane.b32.xlu0 %v1038, 256
  %v1041 = vpop.permute.xlu0 %1040
  %v1042 = vlaneseq
  %v1043 = vshrl.u32 %v1042, 7
  %v1044 = vsub.s32 1, %v1043
  %v1045 = vrot.slane %v1017, %v1044
  %1047 = vbcast.lane.b32.xlu0 %v1045, 256
  %v1048 = vpop.permute.xlu0 %1047
  %v1049 = vadd.f32 %v1033, %v1041
  %v1050 = vadd.f32 %v1034, %v1048
  %v1051 = vsel %vm46, %v1049, -inf
  %v1052 = vrot.slane %v1051, 4
  %v1053 = vmax.f32 %v1051, %v1052
  %v1054 = vrot.slane %v1053, 2
  %v1055 = vmax.f32 %v1053, %v1054
  %v1056 = vrot.slane %v1055, 1
  %v1057 = vmax.f32 %v1055, %v1056
  %v1058 = vsel %vm46, %v1050, -inf
  %v1059 = vrot.slane %v1058, 4
  %v1060 = vmax.f32 %v1058, %v1059
  %v1061 = vrot.slane %v1060, 2
  %v1062 = vmax.f32 %v1060, %v1061
  %v1063 = vrot.slane %v1062, 1
  %v1064 = vmax.f32 %v1062, %v1063
  %v1065 = vlaneseq
  %v1066 = vshrl.u32 %v1065, 7
  %v1067 = vsub.s32 0, %v1066
  %v1068 = vrot.slane %v1016, %v1067
  %1070 = vbcast.lane.b32.xlu0 %v1068, 256
  %v1071 = vpop.permute.xlu0 %1070
  %v1072 = vlaneseq
  %v1073 = vshrl.u32 %v1072, 7
  %v1074 = vsub.s32 1, %v1073
  %v1075 = vrot.slane %v1016, %v1074
  %1077 = vbcast.lane.b32.xlu0 %v1075, 256
  %v1078 = vpop.permute.xlu0 %1077
  %v1079 = vmul.f32 %v939, %v1071
  %v1080 = vmul.f32 %v940, %v1078
  %v1081 = vlaneseq
  %v1082 = vshrl.u32 %v1081, 7
  %v1083 = vsub.s32 0, %v1082
  %v1084 = vrot.slane %v1018, %v1083
  %1086 = vbcast.lane.b32.xlu0 %v1084, 256
  %v1087 = vpop.permute.xlu0 %1086
  %v1088 = vlaneseq
  %v1089 = vshrl.u32 %v1088, 7
  %v1090 = vsub.s32 1, %v1089
  %v1091 = vrot.slane %v1018, %v1090
  %1093 = vbcast.lane.b32.xlu0 %v1091, 256
  %v1094 = vpop.permute.xlu0 %1093
  %v1095 = vadd.f32 %v1079, %v1087
  %v1096 = vadd.f32 %v1080, %v1094
  %v1097 = vsel %vm46, %v1095, -inf
  %v1098 = vrot.slane %v1097, 4
  %v1099 = vmax.f32 %v1097, %v1098
  %v1100 = vrot.slane %v1099, 2
  %v1101 = vmax.f32 %v1099, %v1100
  %v1102 = vrot.slane %v1101, 1
  %v1103 = vmax.f32 %v1101, %v1102
  %v1104 = vsel %vm46, %v1096, -inf
  %v1105 = vrot.slane %v1104, 4
  %v1106 = vmax.f32 %v1104, %v1105
  %v1107 = vrot.slane %v1106, 2
  %v1108 = vmax.f32 %v1106, %v1107
  %v1109 = vrot.slane %v1108, 1
  %v1110 = vmax.f32 %v1108, %v1109
  %v1113 = vsel %vm956, %v1064, %v1057
  %v1117 = vsel %vm956, %v1110, %v1103
  %1118 = vrot.lane.b32.xlu0 %v1117, 32
  %v1119 = vpop.permute.xlu0 %1118
  %1122 = vrot.lane.b32.xlu0 %v1014, 64
  %v1123 = vpop.permute.xlu0 %1122
  %v1125 = vsel %vm46, %v1113, %v1119
  %v1126 = vsel %vm856, %v1125, %v1123
  %v1127 = vpack.c.bf16 %v1126, %v1126
  %v1128 = vld [vmem:[%s3 + $0x14] sm:$0xf]
  %v1129 = vld [vmem:[%s3 + $0x2c] sm:$0xf]
  %v1130 = vld [vmem:[%s3 + $0x44] sm:$0xf]
  %v1131 = vld [vmem:[%s3 + $0x5c] sm:$0xf]
  %v1132 = vld [vmem:[%s3 + $0x74] sm:$0xf]
  %v1133 = vld [vmem:[%s3 + $0x8c] sm:$0xf]
  %v1134 = vld [vmem:[%s3 + $0xa4] sm:$0xf]
  %v1135 = vld [vmem:[%s3 + $0xbc] sm:$0xf]
  %v1136 = vld [vmem:[%s3 + $0xd4] sm:$0xf]
  %v1137 = vld [vmem:[%s3 + $0xec] sm:$0xf]
  %v1138 = vld [vmem:[%s3 + $0x104] sm:$0xf]
  %v1139 = vld [vmem:[%s3 + $0x11c] sm:$0xf]
  %v1140 = vlaneseq
  %v1141 = vshrl.u32 %v1140, 7
  %v1142 = vsub.s32 1, %v1141
  %v1143 = vrot.slane %v24, %v1142
  %v1156 = vunpack.c.l.b16 %v1128
  %v1157 = vunpack.c.l.b16 %v1129
  %v1158 = vunpack.c.l.b16 %v1130
  %v1159 = vunpack.c.l.b16 %v1131
  %v1160 = vunpack.c.l.b16 %v1132
  %v1161 = vunpack.c.l.b16 %v1133
  %v1162 = vunpack.c.l.b16 %v1134
  %v1163 = vunpack.c.l.b16 %v1135
  %v1164 = vunpack.c.l.b16 %v1136
  %v1165 = vunpack.c.l.b16 %v1137
  %v1166 = vunpack.c.l.b16 %v1138
  %v1167 = vunpack.c.l.b16 %v1139
  %v1168 = vpack.c.b16 %v1157, %v1156
  %v1169 = vpack.c.b16 %v1159, %v1158
  %v1170 = vpack.c.b16 %v1161, %v1160
  %v1171 = vpack.c.b16 %v1163, %v1162
  %v1172 = vpack.c.b16 %v1165, %v1164
  %v1173 = vpack.c.b16 %v1167, %v1166
  %vm1180 = vcmask 785408
  %v1182 = vsel %vm1180, %v1127, 0
  %1184 = vmatprep.subr.bf16.mxu0 0
  %1185 = vmatpush1.bf16.msra.mxu0 %v1168
  %1186 = vmatprep.subr.bf16.mxu0 0
  %1187 = vmatpush1.bf16.msra.mxu0 %v1169
  %1188 = vmatprep.subr.bf16.mxu0 0
  %1189 = vmatpush1.bf16.msra.mxu0 %v1170
  %1190 = vmatprep.subr.bf16.mxu0 0
  %1191 = vmatpush1.bf16.msra.mxu0 %v1171
  %1192 = vmatprep.subr.bf16.mxu0 0
  %1193 = vmatpush1.bf16.msra.mxu0 %v1172
  %1194 = vmatprep.subr.bf16.mxu0 0
  %1195 = vmatpush1.bf16.msra.mxu0 %v1173
  %1196 = vmatprep.subr.bf16.mxu0 0
  %1197 = vmatpush1.bf16.msra.mxu0 0
  %1198 = vmatprep.subr.bf16.mxu0 0
  %1199 = vmatpush1.bf16.msra.mxu0 0
  %1200 = vmatprep.subr.bf16.mxu0 0
  %1201 = vmatpush1.bf16.msra.mxu0 0
  %1202 = vmatprep.subr.bf16.mxu0 0
  %1203 = vmatpush1.bf16.msra.mxu0 0
  %1204 = vmatprep.subr.bf16.mxu0 0
  %1205 = vmatpush1.bf16.msra.mxu0 0
  %1206 = vmatprep.subr.bf16.mxu0 0
  %1207 = vmatpush1.bf16.msra.mxu0 0
  %1208 = vmatprep.subr.bf16.mxu0 0
  %1209 = vmatpush1.bf16.msra.mxu0 0
  %1210 = vmatprep.subr.bf16.mxu0 0
  %1211 = vmatpush1.bf16.msra.mxu0 0
  %1212 = vmatprep.subr.bf16.mxu0 0
  %1213 = vmatpush1.bf16.msra.mxu0 0
  %1214 = vmatprep.subr.bf16.mxu0 0
  %1215 = vmatpush1.bf16.msra.mxu0 0
  %1216 = vmatprep.mubr.bf16.mxu0 0
  %1217 = vmatmul.mubr.bf16.gmra.mrb[0].mxu0 %v1182
  %v1218 = vpop.f32.mrb[0].mxu0
  %v1219 = vadd.f32 %v1143, %v1218
  %v1220 = vpop.f32.mrb[0].mxu0
  %v1221 = vpop.f32.mrb[0].mxu0
  %v1222 = vpop.f32.mrb[0].mxu0
  %1223 = vdwg.mxu0
  %vm1224 = vcmask 1041408
  %v1225 = vsel %vm1224, %v1219, 0.0
  %1226 = vst [vmem:[%s5] sm:$0xff] %v1225
  // Predicated region
  $region22: #{_lambda_.1} parent=0 // pred_check
    _
  $region23: #{_lambda_.1} parent=0 // pred_check_branch
    %1228 = sbr.rel (0) target = $region25
  $region24: #{_lambda_.1} parent=0 // pred_region
    _
  $region25: #{_lambda_.1} parent=0 // pred_fallthru
    _
  // Predicated region
  $region26: #{_lambda_.1} parent=0 // pred_check
    _
  $region27: #{_lambda_.1} parent=0 // pred_check_branch
    %1230 = sbr.rel (0) target = $region29
  $region28: #{_lambda_.1} parent=0 // pred_region
    _
  $region29: #{_lambda_.1} parent=0 // pred_fallthru
    _

</llo_original>
